<compile_context>
chip_gen: v6e
topology: v6e:2x2x1
jax: 0.10.0
libtpu: 0.0.40
codegen_flags: <defaults>
</compile_context>

<pallas_src>
import functools

import numpy as np
import jax
import jax.numpy as jnp
from jax import lax
from jax.experimental import pallas as pl
from jax.experimental.pallas import tpu as pltpu

EPS = 1e-5


def _round_up(x, m):
    return ((x + m - 1) // m) * m


def _tap_matrix(xv, K, stride, L_out):
    """Fused-tap matrix (K*C, L_out) from xv (C, L_padded).

    Row k*C + c, column j  ==  xv[c, j*stride + k].  Slabs are (C, L_out) with
    C a multiple of 8, so the sublane concat is tile-aligned; the lane offsets
    k are cheap in-register shifts.
    """
    C = xv.shape[0]
    slabs = []
    for k in range(K):
        if stride == 1:
            sl = xv[:, k:k + L_out]
        else:
            # TODO(synk): for stride > 1, de-interleave length positions in the
            # wrapper to avoid strided lane slices (v5e note); functional as-is.
            sl = lax.slice(xv, (0, k), (C, k + (L_out - 1) * stride + 1), (1, stride))
        slabs.append(sl)
    return jnp.concatenate(slabs, axis=0)


# -------- pass A: conv1 (K taps, stride) + downsample 1x1 conv (stride) --------
def _conv1_ds_kernel(x_ref, w1_ref, wd_ref,
                     y1_ref, yd_ref, s1_ref, q1_ref, sd_ref, qd_ref,
                     *, K, stride, pad, L_out):
    xv = x_ref[0]                                              # (Cin_p, L + 2*pad)

    taps = _tap_matrix(xv, K, stride, L_out)                   # (K*Cin_p, L_out)
    y1 = jnp.dot(w1_ref[...], taps, preferred_element_type=jnp.float32)

    if stride == 1:
        xd = xv[:, pad:pad + L_out]
    else:
        xd = lax.slice(xv, (0, pad),
                       (xv.shape[0], pad + (L_out - 1) * stride + 1), (1, stride))
    yd = jnp.dot(wd_ref[...], xd, preferred_element_type=jnp.float32)

    y1_ref[0] = y1
    yd_ref[0] = yd
    # one-pass per-sample BN statistics (reduced over N in the wrapper)
    s1_ref[0] = jnp.sum(y1, axis=1, keepdims=True)
    q1_ref[0] = jnp.sum(y1 * y1, axis=1, keepdims=True)
    sd_ref[0] = jnp.sum(yd, axis=1, keepdims=True)
    qd_ref[0] = jnp.sum(yd * yd, axis=1, keepdims=True)


# -------- pass B: folded BN1 + ReLU + conv2 (K taps, stride 1) -----------------
def _conv2_kernel(y1_ref, w2_ref, a1_ref, b1_ref,
                  y2_ref, s2_ref, q2_ref, *, K, pad, L_out):
    y1 = y1_ref[0]                                             # (Cout_p, L_out)
    h1 = jnp.maximum(y1 * a1_ref[...] + b1_ref[...], 0.0)      # folded BN1 + ReLU
    halo = jnp.zeros((h1.shape[0], pad), h1.dtype)             # only the halo is zeroed
    h1p = jnp.concatenate([halo, h1, halo], axis=1)            # (Cout_p, L_out + 2*pad)

    taps = _tap_matrix(h1p, K, 1, L_out)                       # (K*Cout_p, L_out)
    y2 = jnp.dot(w2_ref[...], taps, preferred_element_type=jnp.float32)

    y2_ref[0] = y2
    s2_ref[0] = jnp.sum(y2, axis=1, keepdims=True)
    q2_ref[0] = jnp.sum(y2 * y2, axis=1, keepdims=True)


# -------- pass C: folded BN2 + folded BN_d + residual add + ReLU ---------------
def _fuse_kernel(y2_ref, yd_ref, a2_ref, b2_ref, ad_ref, bd_ref, o_ref):
    o_ref[0] = jnp.maximum(
        y2_ref[0] * a2_ref[...] + b2_ref[...] +
        yd_ref[0] * ad_ref[...] + bd_ref[...], 0.0)


def _fold_bn(sums, sqs, gamma, beta, count, Cout, Cout_p):
    """Fold training-mode BN into per-channel (scale, shift), padded to Cout_p."""
    mean = jnp.sum(sums[:, :Cout, 0], axis=0) / count
    var = jnp.maximum(jnp.sum(sqs[:, :Cout, 0], axis=0) / count - mean * mean, 0.0)
    scale = gamma * lax.rsqrt(var + EPS)
    shift = beta - mean * scale
    pc = Cout_p - Cout
    return (jnp.pad(scale, (0, pc)).reshape(Cout_p, 1),
            jnp.pad(shift, (0, pc)).reshape(Cout_p, 1))


@functools.partial(jax.jit, static_argnames=("kernel_size", "stride"))
def residual_block_1d(x_ncl, params, *, kernel_size=7, stride=1):
    """x_ncl: (N, C_in, L) as nn.Conv1d expects.  Returns (N, C_out, L_out)."""
    N, Cin, L = x_ncl.shape
    K = kernel_size
    assert K % 2 == 1, "module semantics assume odd kernel_size"
    pad = K // 2
    L_out = (L + 2 * pad - K) // stride + 1
    L_pad = L + 2 * pad
    Cout = params['w1'].shape[0]
    Cin_p = _round_up(max(Cin, 8), 8)
    Cout_p = _round_up(max(Cout, 8), 8)

    f32 = jnp.float32
    # single pad op (no transposes): channels -> multiple of 8 for tile-aligned
    # tap slabs, length -> conv halo.
    xp = jnp.pad(x_ncl.astype(f32), ((0, 0), (0, Cin_p - Cin), (pad, pad)))

    # PyTorch conv weights (Cout, Cin, K) -> fused-tap matrices.
    w1r = jnp.pad(jnp.transpose(params['w1'].astype(f32), (0, 2, 1)),
                  ((0, Cout_p - Cout), (0, 0), (0, Cin_p - Cin))
                  ).reshape(Cout_p, K * Cin_p)
    w2r = jnp.pad(jnp.transpose(params['w2'].astype(f32), (0, 2, 1)),
                  ((0, Cout_p - Cout), (0, 0), (0, Cout_p - Cout))
                  ).reshape(Cout_p, K * Cout_p)
    wdr = jnp.pad(params['wd'][:, :, 0].astype(f32),
                  ((0, Cout_p - Cout), (0, Cin_p - Cin)))

    cparams = pltpu.CompilerParams(
        dimension_semantics=("parallel",),        # shard batch steps across TCs
        vmem_limit_bytes=32 * 1024 * 1024)        # explicit; per-step tiles are far below this

    row3 = lambda n: (n, 0, 0)
    cst2 = lambda n: (0, 0)
    act_spec = pl.BlockSpec((1, Cout_p, L_out), row3)
    stat_spec = pl.BlockSpec((1, Cout_p, 1), row3)
    act_shape = jax.ShapeDtypeStruct((N, Cout_p, L_out), f32)
    stat_shape = jax.ShapeDtypeStruct((N, Cout_p, 1), f32)

    # ---------------- pass A ----------------
    y1, yd, s1, q1, sd, qd = pl.pallas_call(
        functools.partial(_conv1_ds_kernel, K=K, stride=stride, pad=pad, L_out=L_out),
        grid=(N,),
        in_specs=[pl.BlockSpec((1, Cin_p, L_pad), row3),
                  pl.BlockSpec((Cout_p, K * Cin_p), cst2),
                  pl.BlockSpec((Cout_p, Cin_p), cst2)],
        out_specs=(act_spec, act_spec, stat_spec, stat_spec, stat_spec, stat_spec),
        out_shape=(act_shape, act_shape, stat_shape, stat_shape, stat_shape, stat_shape),
        compiler_params=cparams,
    )(xp, w1r, wdr)

    count = N * L_out
    a1, b1 = _fold_bn(s1, q1, params['g1'].astype(f32), params['b1'].astype(f32),
                      count, Cout, Cout_p)
    ad, bd = _fold_bn(sd, qd, params['gd'].astype(f32), params['bd'].astype(f32),
                      count, Cout, Cout_p)

    # ---------------- pass B ----------------
    y2, s2, q2 = pl.pallas_call(
        functools.partial(_conv2_kernel, K=K, pad=pad, L_out=L_out),
        grid=(N,),
        in_specs=[act_spec,
                  pl.BlockSpec((Cout_p, K * Cout_p), cst2),
                  pl.BlockSpec((Cout_p, 1), cst2),
                  pl.BlockSpec((Cout_p, 1), cst2)],
        out_specs=(act_spec, stat_spec, stat_spec),
        out_shape=(act_shape, stat_shape, stat_shape),
        compiler_params=cparams,
    )(y1, w2r, a1, b1)

    a2, b2 = _fold_bn(s2, q2, params['g2'].astype(f32), params['b2'].astype(f32),
                      count, Cout, Cout_p)

    # ---------------- pass C ----------------
    out = pl.pallas_call(
        _fuse_kernel,
        grid=(N,),
        in_specs=[act_spec, act_spec,
                  pl.BlockSpec((Cout_p, 1), cst2), pl.BlockSpec((Cout_p, 1), cst2),
                  pl.BlockSpec((Cout_p, 1), cst2), pl.BlockSpec((Cout_p, 1), cst2)],
        out_specs=act_spec,
        out_shape=act_shape,
        compiler_params=cparams,
    )(y2, yd, a2, b2, ad, bd)

    if Cout_p != Cout:
        out = out[:, :Cout, :]
    return out                                   # already (N, C_out, L_out) NCL


# ---------------- pure-JAX reference (NCL, mirrors the PyTorch module) ----------
def residual_block_1d_ref(x_ncl, params, *, kernel_size=7, stride=1):
    K = kernel_size
    pad = K // 2

    def conv1d(x, w, s, p):
        return lax.conv_general_dilated(
            x, w, window_strides=(s,), padding=[(p, p)],
            dimension_numbers=('NCH', 'OIH', 'NCH'),
            precision=lax.Precision.HIGHEST)

    def bn(x, g, b):
        mean = jnp.mean(x, axis=(0, 2), keepdims=True)
        var = jnp.mean(jnp.square(x - mean), axis=(0, 2), keepdims=True)
        return (x - mean) * lax.rsqrt(var + EPS) * g.reshape(1, -1, 1) + b.reshape(1, -1, 1)

    h = conv1d(x_ncl, params['w1'], stride, pad)
    h = jnp.maximum(bn(h, params['g1'], params['b1']), 0.0)
    h = conv1d(h, params['w2'], 1, pad)
    h = bn(h, params['g2'], params['b2'])
    idn = bn(conv1d(x_ncl, params['wd'], stride, 0), params['gd'], params['bd'])
    return jnp.maximum(h + idn, 0.0)


if __name__ == "__main__":
    N, Cin, Cout, L, K, STRIDE = 2, 4, 8, 16, 7, 1

    key = jax.random.PRNGKey(0)
    ks = jax.random.split(key, 10)
    params = {
        'w1': 0.2 * jax.random.normal(ks[0], (Cout, Cin, K), jnp.float32),
        'g1': 1.0 + 0.1 * jax.random.normal(ks[1], (Cout,), jnp.float32),
        'b1': 0.1 * jax.random.normal(ks[2], (Cout,), jnp.float32),
        'w2': 0.2 * jax.random.normal(ks[3], (Cout, Cout, K), jnp.float32),
        'g2': 1.0 + 0.1 * jax.random.normal(ks[4], (Cout,), jnp.float32),
        'b2': 0.1 * jax.random.normal(ks[5], (Cout,), jnp.float32),
        'wd': 0.2 * jax.random.normal(ks[6], (Cout, Cin, 1), jnp.float32),
        'gd': 1.0 + 0.1 * jax.random.normal(ks[7], (Cout,), jnp.float32),
        'bd': 0.1 * jax.random.normal(ks[8], (Cout,), jnp.float32),
    }
    x = jax.random.normal(ks[9], (N, Cin, L), jnp.float32)       # PyTorch NCL input

    out = jax.block_until_ready(residual_block_1d(x, params, kernel_size=K, stride=STRIDE))
    ref = jax.block_until_ready(residual_block_1d_ref(x, params, kernel_size=K, stride=STRIDE))

    assert out.shape == ref.shape, (out.shape, ref.shape)
    np.testing.assert_allclose(np.asarray(out), np.asarray(ref), atol=2e-2, rtol=2e-2)

    print("KERNEL_OK")
</pallas_src>

<mosaic_0001>
module attributes {stable_mosaic.version = 11 : i64} {
  func.func @_conv1_ds_kernel(%arg0: i32, %arg1: memref<1x8x22xf32, #tpu.memory_space<vmem>>, %arg2: memref<8x56xf32, #tpu.memory_space<vmem>>, %arg3: memref<8x8xf32, #tpu.memory_space<vmem>>, %arg4: memref<1x8x16xf32, #tpu.memory_space<vmem>>, %arg5: memref<1x8x16xf32, #tpu.memory_space<vmem>>, %arg6: memref<1x8x1xf32, #tpu.memory_space<vmem>>, %arg7: memref<1x8x1xf32, #tpu.memory_space<vmem>>, %arg8: memref<1x8x1xf32, #tpu.memory_space<vmem>>, %arg9: memref<1x8x1xf32, #tpu.memory_space<vmem>>) attributes {dimension_semantics = [#tpu.dimension_semantics<parallel>], iteration_bounds = array<i64: 2>, scalar_prefetch = 0 : i64, scratch_operands = 0 : i64, tpu.core_type = #tpu.core_type<tc>, window_params = [{transform_indices = @transform_0, window_bounds = array<i64: 1, 8, 22>}, {pipeline_mode = #tpu.pipeline_mode<synchronous>, transform_indices = @transform_1, window_bounds = array<i64: 8, 56>}, {pipeline_mode = #tpu.pipeline_mode<synchronous>, transform_indices = @transform_2, window_bounds = array<i64: 8, 8>}, {transform_indices = @transform_3, window_bounds = array<i64: 1, 8, 16>}, {transform_indices = @transform_4, window_bounds = array<i64: 1, 8, 16>}, {transform_indices = @transform_5, window_bounds = array<i64: 1, 8, 1>}, {transform_indices = @transform_6, window_bounds = array<i64: 1, 8, 1>}, {transform_indices = @transform_7, window_bounds = array<i64: 1, 8, 1>}, {transform_indices = @transform_8, window_bounds = array<i64: 1, 8, 1>}]} {
    %c0 = arith.constant 0 : index
    %c0_0 = arith.constant 0 : index
    %c0_1 = arith.constant 0 : index
    %0 = vector.load %arg1[%c0, %c0_0, %c0_1] : memref<1x8x22xf32, #tpu.memory_space<vmem>>, vector<1x8x22xf32>
    %1 = vector.shape_cast %0 : vector<1x8x22xf32> to vector<8x22xf32>
    %2 = vector.extract_strided_slice %1 {offsets = [0, 0], sizes = [8, 16], strides = [1, 1]} : vector<8x22xf32> to vector<8x16xf32>
    %3 = vector.extract_strided_slice %1 {offsets = [0, 1], sizes = [8, 16], strides = [1, 1]} : vector<8x22xf32> to vector<8x16xf32>
    %4 = vector.extract_strided_slice %1 {offsets = [0, 2], sizes = [8, 16], strides = [1, 1]} : vector<8x22xf32> to vector<8x16xf32>
    %5 = vector.extract_strided_slice %1 {offsets = [0, 3], sizes = [8, 16], strides = [1, 1]} : vector<8x22xf32> to vector<8x16xf32>
    %6 = vector.extract_strided_slice %1 {offsets = [0, 4], sizes = [8, 16], strides = [1, 1]} : vector<8x22xf32> to vector<8x16xf32>
    %7 = vector.extract_strided_slice %1 {offsets = [0, 5], sizes = [8, 16], strides = [1, 1]} : vector<8x22xf32> to vector<8x16xf32>
    %8 = vector.extract_strided_slice %1 {offsets = [0, 6], sizes = [8, 16], strides = [1, 1]} : vector<8x22xf32> to vector<8x16xf32>
    %9 = tpu.concatenate %2, %3, %4, %5, %6, %7, %8 in 0 : vector<8x16xf32>, vector<8x16xf32>, vector<8x16xf32>, vector<8x16xf32>, vector<8x16xf32>, vector<8x16xf32>, vector<8x16xf32> -> vector<56x16xf32>
    %c0_2 = arith.constant 0 : index
    %c0_3 = arith.constant 0 : index
    %10 = vector.load %arg2[%c0_2, %c0_3] : memref<8x56xf32, #tpu.memory_space<vmem>>, vector<8x56xf32>
    %cst = arith.constant dense<0.000000e+00> : vector<8x16xf32>
    %11 = tpu.matmul %10, %9, %cst {dimension_numbers = #tpu.dot_dimension_numbers<[1], [0], [0], [1], [0, 0, 1, 1], [], []>} : vector<8x56xf32>, vector<56x16xf32>, vector<8x16xf32> -> vector<8x16xf32>
    %12 = vector.extract_strided_slice %1 {offsets = [0, 3], sizes = [8, 16], strides = [1, 1]} : vector<8x22xf32> to vector<8x16xf32>
    %c0_4 = arith.constant 0 : index
    %c0_5 = arith.constant 0 : index
    %13 = vector.load %arg3[%c0_4, %c0_5] : memref<8x8xf32, #tpu.memory_space<vmem>>, vector<8x8xf32>
    %cst_6 = arith.constant dense<0.000000e+00> : vector<8x16xf32>
    %14 = tpu.matmul %13, %12, %cst_6 {dimension_numbers = #tpu.dot_dimension_numbers<[1], [0], [0], [1], [0, 0, 1, 1], [], []>} : vector<8x8xf32>, vector<8x16xf32>, vector<8x16xf32> -> vector<8x16xf32>
    %c0_7 = arith.constant 0 : index
    %c0_8 = arith.constant 0 : index
    %c0_9 = arith.constant 0 : index
    %15 = vector.load %arg4[%c0_7, %c0_8, %c0_9] : memref<1x8x16xf32, #tpu.memory_space<vmem>>, vector<1x8x16xf32>
    %16 = vector.shape_cast %15 : vector<1x8x16xf32> to vector<8x16xf32>
    %17 = vector.shape_cast %11 : vector<8x16xf32> to vector<1x8x16xf32>
    tpu.vector_store %arg4[%c0_7, %c0_8, %c0_9], %17 {strides = array<i32>} : memref<1x8x16xf32, #tpu.memory_space<vmem>>, vector<1x8x16xf32>,
    %c0_10 = arith.constant 0 : index
    %c0_11 = arith.constant 0 : index
    %c0_12 = arith.constant 0 : index
    %18 = vector.load %arg5[%c0_10, %c0_11, %c0_12] : memref<1x8x16xf32, #tpu.memory_space<vmem>>, vector<1x8x16xf32>
    %19 = vector.shape_cast %18 : vector<1x8x16xf32> to vector<8x16xf32>
    %20 = vector.shape_cast %14 : vector<8x16xf32> to vector<1x8x16xf32>
    tpu.vector_store %arg5[%c0_10, %c0_11, %c0_12], %20 {strides = array<i32>} : memref<1x8x16xf32, #tpu.memory_space<vmem>>, vector<1x8x16xf32>,
    %cst_13 = arith.constant dense<0.000000e+00> : vector<8xf32>
    %21 = vector.multi_reduction <add>, %11, %cst_13 [1] : vector<8x16xf32> to vector<8xf32>
    %22 = vector.shape_cast %21 : vector<8xf32> to vector<8x1xf32>
    %c0_14 = arith.constant 0 : index
    %c0_15 = arith.constant 0 : index
    %c0_16 = arith.constant 0 : index
    %23 = vector.load %arg6[%c0_14, %c0_15, %c0_16] : memref<1x8x1xf32, #tpu.memory_space<vmem>>, vector<1x8x1xf32>
    %24 = vector.shape_cast %23 : vector<1x8x1xf32> to vector<8x1xf32>
    %25 = vector.shape_cast %22 : vector<8x1xf32> to vector<1x8x1xf32>
    tpu.vector_store %arg6[%c0_14, %c0_15, %c0_16], %25 {strides = array<i32>} : memref<1x8x1xf32, #tpu.memory_space<vmem>>, vector<1x8x1xf32>,
    %26 = arith.mulf %11, %11 : vector<8x16xf32>
    %cst_17 = arith.constant dense<0.000000e+00> : vector<8xf32>
    %27 = vector.multi_reduction <add>, %26, %cst_17 [1] : vector<8x16xf32> to vector<8xf32>
    %28 = vector.shape_cast %27 : vector<8xf32> to vector<8x1xf32>
    %c0_18 = arith.constant 0 : index
    %c0_19 = arith.constant 0 : index
    %c0_20 = arith.constant 0 : index
    %29 = vector.load %arg7[%c0_18, %c0_19, %c0_20] : memref<1x8x1xf32, #tpu.memory_space<vmem>>, vector<1x8x1xf32>
    %30 = vector.shape_cast %29 : vector<1x8x1xf32> to vector<8x1xf32>
    %31 = vector.shape_cast %28 : vector<8x1xf32> to vector<1x8x1xf32>
    tpu.vector_store %arg7[%c0_18, %c0_19, %c0_20], %31 {strides = array<i32>} : memref<1x8x1xf32, #tpu.memory_space<vmem>>, vector<1x8x1xf32>,
    %cst_21 = arith.constant dense<0.000000e+00> : vector<8xf32>
    %32 = vector.multi_reduction <add>, %14, %cst_21 [1] : vector<8x16xf32> to vector<8xf32>
    %33 = vector.shape_cast %32 : vector<8xf32> to vector<8x1xf32>
    %c0_22 = arith.constant 0 : index
    %c0_23 = arith.constant 0 : index
    %c0_24 = arith.constant 0 : index
    %34 = vector.load %arg8[%c0_22, %c0_23, %c0_24] : memref<1x8x1xf32, #tpu.memory_space<vmem>>, vector<1x8x1xf32>
    %35 = vector.shape_cast %34 : vector<1x8x1xf32> to vector<8x1xf32>
    %36 = vector.shape_cast %33 : vector<8x1xf32> to vector<1x8x1xf32>
    tpu.vector_store %arg8[%c0_22, %c0_23, %c0_24], %36 {strides = array<i32>} : memref<1x8x1xf32, #tpu.memory_space<vmem>>, vector<1x8x1xf32>,
    %37 = arith.mulf %14, %14 : vector<8x16xf32>
    %cst_25 = arith.constant dense<0.000000e+00> : vector<8xf32>
    %38 = vector.multi_reduction <add>, %37, %cst_25 [1] : vector<8x16xf32> to vector<8xf32>
    %39 = vector.shape_cast %38 : vector<8xf32> to vector<8x1xf32>
    %c0_26 = arith.constant 0 : index
    %c0_27 = arith.constant 0 : index
    %c0_28 = arith.constant 0 : index
    %40 = vector.load %arg9[%c0_26, %c0_27, %c0_28] : memref<1x8x1xf32, #tpu.memory_space<vmem>>, vector<1x8x1xf32>
    %41 = vector.shape_cast %40 : vector<1x8x1xf32> to vector<8x1xf32>
    %42 = vector.shape_cast %39 : vector<8x1xf32> to vector<1x8x1xf32>
    tpu.vector_store %arg9[%c0_26, %c0_27, %c0_28], %42 {strides = array<i32>} : memref<1x8x1xf32, #tpu.memory_space<vmem>>, vector<1x8x1xf32>,
    return
  }
  func.func @transform_0(%arg0: i32) -> (i32, i32, i32) {
    %c0_i32 = arith.constant 0 : i32
    %c0_i32_0 = arith.constant 0 : i32
    %c0_i32_1 = arith.constant 0 : i32
    return %arg0, %c0_i32, %c0_i32_0 : i32, i32, i32
  }
  func.func @transform_1(%arg0: i32) -> (i32, i32) {
    %c0_i32 = arith.constant 0 : i32
    %c0_i32_0 = arith.constant 0 : i32
    %c0_i32_1 = arith.constant 0 : i32
    return %c0_i32, %c0_i32_0 : i32, i32
  }
  func.func @transform_2(%arg0: i32) -> (i32, i32) {
    %c0_i32 = arith.constant 0 : i32
    %c0_i32_0 = arith.constant 0 : i32
    %c0_i32_1 = arith.constant 0 : i32
    return %c0_i32, %c0_i32_0 : i32, i32
  }
  func.func @transform_3(%arg0: i32) -> (i32, i32, i32) {
    %c0_i32 = arith.constant 0 : i32
    %c0_i32_0 = arith.constant 0 : i32
    %c0_i32_1 = arith.constant 0 : i32
    return %arg0, %c0_i32, %c0_i32_0 : i32, i32, i32
  }
  func.func @transform_4(%arg0: i32) -> (i32, i32, i32) {
    %c0_i32 = arith.constant 0 : i32
    %c0_i32_0 = arith.constant 0 : i32
    %c0_i32_1 = arith.constant 0 : i32
    return %arg0, %c0_i32, %c0_i32_0 : i32, i32, i32
  }
  func.func @transform_5(%arg0: i32) -> (i32, i32, i32) {
    %c0_i32 = arith.constant 0 : i32
    %c0_i32_0 = arith.constant 0 : i32
    %c0_i32_1 = arith.constant 0 : i32
    return %arg0, %c0_i32, %c0_i32_0 : i32, i32, i32
  }
  func.func @transform_6(%arg0: i32) -> (i32, i32, i32) {
    %c0_i32 = arith.constant 0 : i32
    %c0_i32_0 = arith.constant 0 : i32
    %c0_i32_1 = arith.constant 0 : i32
    return %arg0, %c0_i32, %c0_i32_0 : i32, i32, i32
  }
  func.func @transform_7(%arg0: i32) -> (i32, i32, i32) {
    %c0_i32 = arith.constant 0 : i32
    %c0_i32_0 = arith.constant 0 : i32
    %c0_i32_1 = arith.constant 0 : i32
    return %arg0, %c0_i32, %c0_i32_0 : i32, i32, i32
  }
  func.func @transform_8(%arg0: i32) -> (i32, i32, i32) {
    %c0_i32 = arith.constant 0 : i32
    %c0_i32_0 = arith.constant 0 : i32
    %c0_i32_1 = arith.constant 0 : i32
    return %arg0, %c0_i32, %c0_i32_0 : i32, i32, i32
  }
}

module attributes {stable_mosaic.version = 11 : i64} {
  func.func @_conv2_kernel(%arg0: i32, %arg1: memref<1x8x16xf32, #tpu.memory_space<vmem>>, %arg2: memref<8x56xf32, #tpu.memory_space<vmem>>, %arg3: memref<8x1xf32, #tpu.memory_space<vmem>>, %arg4: memref<8x1xf32, #tpu.memory_space<vmem>>, %arg5: memref<1x8x16xf32, #tpu.memory_space<vmem>>, %arg6: memref<1x8x1xf32, #tpu.memory_space<vmem>>, %arg7: memref<1x8x1xf32, #tpu.memory_space<vmem>>) attributes {dimension_semantics = [#tpu.dimension_semantics<parallel>], iteration_bounds = array<i64: 2>, scalar_prefetch = 0 : i64, scratch_operands = 0 : i64, tpu.core_type = #tpu.core_type<tc>, window_params = [{transform_indices = @transform_0, window_bounds = array<i64: 1, 8, 16>}, {pipeline_mode = #tpu.pipeline_mode<synchronous>, transform_indices = @transform_1, window_bounds = array<i64: 8, 56>}, {pipeline_mode = #tpu.pipeline_mode<synchronous>, transform_indices = @transform_2, window_bounds = array<i64: 8, 1>}, {pipeline_mode = #tpu.pipeline_mode<synchronous>, transform_indices = @transform_3, window_bounds = array<i64: 8, 1>}, {transform_indices = @transform_4, window_bounds = array<i64: 1, 8, 16>}, {transform_indices = @transform_5, window_bounds = array<i64: 1, 8, 1>}, {transform_indices = @transform_6, window_bounds = array<i64: 1, 8, 1>}]} {
    %c0 = arith.constant 0 : index
    %c0_0 = arith.constant 0 : index
    %c0_1 = arith.constant 0 : index
    %0 = vector.load %arg1[%c0, %c0_0, %c0_1] : memref<1x8x16xf32, #tpu.memory_space<vmem>>, vector<1x8x16xf32>
    %1 = vector.shape_cast %0 : vector<1x8x16xf32> to vector<8x16xf32>
    %c0_2 = arith.constant 0 : index
    %c0_3 = arith.constant 0 : index
    %2 = vector.load %arg3[%c0_2, %c0_3] : memref<8x1xf32, #tpu.memory_space<vmem>>, vector<8x1xf32>
    %3 = vector.broadcast %2 : vector<8x1xf32> to vector<8x16xf32>
    %4 = arith.mulf %1, %3 : vector<8x16xf32>
    %c0_4 = arith.constant 0 : index
    %c0_5 = arith.constant 0 : index
    %5 = vector.load %arg4[%c0_4, %c0_5] : memref<8x1xf32, #tpu.memory_space<vmem>>, vector<8x1xf32>
    %6 = vector.broadcast %5 : vector<8x1xf32> to vector<8x16xf32>
    %7 = arith.addf %4, %6 : vector<8x16xf32>
    %cst = arith.constant 0.000000e+00 : f32
    %8 = vector.broadcast %cst : f32 to vector<8x16xf32>
    %9 = arith.maximumf %7, %8 : vector<8x16xf32>
    %cst_6 = arith.constant 0.000000e+00 : f32
    %10 = vector.broadcast %cst_6 : f32 to vector<8x3xf32>
    %11 = tpu.concatenate %10, %9, %10 in 1 : vector<8x3xf32>, vector<8x16xf32>, vector<8x3xf32> -> vector<8x22xf32>
    %12 = vector.extract_strided_slice %11 {offsets = [0, 0], sizes = [8, 16], strides = [1, 1]} : vector<8x22xf32> to vector<8x16xf32>
    %13 = vector.extract_strided_slice %11 {offsets = [0, 1], sizes = [8, 16], strides = [1, 1]} : vector<8x22xf32> to vector<8x16xf32>
    %14 = vector.extract_strided_slice %11 {offsets = [0, 2], sizes = [8, 16], strides = [1, 1]} : vector<8x22xf32> to vector<8x16xf32>
    %15 = vector.extract_strided_slice %11 {offsets = [0, 3], sizes = [8, 16], strides = [1, 1]} : vector<8x22xf32> to vector<8x16xf32>
    %16 = vector.extract_strided_slice %11 {offsets = [0, 4], sizes = [8, 16], strides = [1, 1]} : vector<8x22xf32> to vector<8x16xf32>
    %17 = vector.extract_strided_slice %11 {offsets = [0, 5], sizes = [8, 16], strides = [1, 1]} : vector<8x22xf32> to vector<8x16xf32>
    %18 = vector.extract_strided_slice %11 {offsets = [0, 6], sizes = [8, 16], strides = [1, 1]} : vector<8x22xf32> to vector<8x16xf32>
    %19 = tpu.concatenate %12, %13, %14, %15, %16, %17, %18 in 0 : vector<8x16xf32>, vector<8x16xf32>, vector<8x16xf32>, vector<8x16xf32>, vector<8x16xf32>, vector<8x16xf32>, vector<8x16xf32> -> vector<56x16xf32>
    %c0_7 = arith.constant 0 : index
    %c0_8 = arith.constant 0 : index
    %20 = vector.load %arg2[%c0_7, %c0_8] : memref<8x56xf32, #tpu.memory_space<vmem>>, vector<8x56xf32>
    %cst_9 = arith.constant dense<0.000000e+00> : vector<8x16xf32>
    %21 = tpu.matmul %20, %19, %cst_9 {dimension_numbers = #tpu.dot_dimension_numbers<[1], [0], [0], [1], [0, 0, 1, 1], [], []>} : vector<8x56xf32>, vector<56x16xf32>, vector<8x16xf32> -> vector<8x16xf32>
    %c0_10 = arith.constant 0 : index
    %c0_11 = arith.constant 0 : index
    %c0_12 = arith.constant 0 : index
    %22 = vector.load %arg5[%c0_10, %c0_11, %c0_12] : memref<1x8x16xf32, #tpu.memory_space<vmem>>, vector<1x8x16xf32>
    %23 = vector.shape_cast %22 : vector<1x8x16xf32> to vector<8x16xf32>
    %24 = vector.shape_cast %21 : vector<8x16xf32> to vector<1x8x16xf32>
    tpu.vector_store %arg5[%c0_10, %c0_11, %c0_12], %24 {strides = array<i32>} : memref<1x8x16xf32, #tpu.memory_space<vmem>>, vector<1x8x16xf32>,
    %cst_13 = arith.constant dense<0.000000e+00> : vector<8xf32>
    %25 = vector.multi_reduction <add>, %21, %cst_13 [1] : vector<8x16xf32> to vector<8xf32>
    %26 = vector.shape_cast %25 : vector<8xf32> to vector<8x1xf32>
    %c0_14 = arith.constant 0 : index
    %c0_15 = arith.constant 0 : index
    %c0_16 = arith.constant 0 : index
    %27 = vector.load %arg6[%c0_14, %c0_15, %c0_16] : memref<1x8x1xf32, #tpu.memory_space<vmem>>, vector<1x8x1xf32>
    %28 = vector.shape_cast %27 : vector<1x8x1xf32> to vector<8x1xf32>
    %29 = vector.shape_cast %26 : vector<8x1xf32> to vector<1x8x1xf32>
    tpu.vector_store %arg6[%c0_14, %c0_15, %c0_16], %29 {strides = array<i32>} : memref<1x8x1xf32, #tpu.memory_space<vmem>>, vector<1x8x1xf32>,
    %30 = arith.mulf %21, %21 : vector<8x16xf32>
    %cst_17 = arith.constant dense<0.000000e+00> : vector<8xf32>
    %31 = vector.multi_reduction <add>, %30, %cst_17 [1] : vector<8x16xf32> to vector<8xf32>
    %32 = vector.shape_cast %31 : vector<8xf32> to vector<8x1xf32>
    %c0_18 = arith.constant 0 : index
    %c0_19 = arith.constant 0 : index
    %c0_20 = arith.constant 0 : index
    %33 = vector.load %arg7[%c0_18, %c0_19, %c0_20] : memref<1x8x1xf32, #tpu.memory_space<vmem>>, vector<1x8x1xf32>
    %34 = vector.shape_cast %33 : vector<1x8x1xf32> to vector<8x1xf32>
    %35 = vector.shape_cast %32 : vector<8x1xf32> to vector<1x8x1xf32>
    tpu.vector_store %arg7[%c0_18, %c0_19, %c0_20], %35 {strides = array<i32>} : memref<1x8x1xf32, #tpu.memory_space<vmem>>, vector<1x8x1xf32>,
    return
  }
  func.func @transform_0(%arg0: i32) -> (i32, i32, i32) {
    %c0_i32 = arith.constant 0 : i32
    %c0_i32_0 = arith.constant 0 : i32
    %c0_i32_1 = arith.constant 0 : i32
    return %arg0, %c0_i32, %c0_i32_0 : i32, i32, i32
  }
  func.func @transform_1(%arg0: i32) -> (i32, i32) {
    %c0_i32 = arith.constant 0 : i32
    %c0_i32_0 = arith.constant 0 : i32
    %c0_i32_1 = arith.constant 0 : i32
    return %c0_i32, %c0_i32_0 : i32, i32
  }
  func.func @transform_2(%arg0: i32) -> (i32, i32) {
    %c0_i32 = arith.constant 0 : i32
    %c0_i32_0 = arith.constant 0 : i32
    %c0_i32_1 = arith.constant 0 : i32
    return %c0_i32, %c0_i32_0 : i32, i32
  }
  func.func @transform_3(%arg0: i32) -> (i32, i32) {
    %c0_i32 = arith.constant 0 : i32
    %c0_i32_0 = arith.constant 0 : i32
    %c0_i32_1 = arith.constant 0 : i32
    return %c0_i32, %c0_i32_0 : i32, i32
  }
  func.func @transform_4(%arg0: i32) -> (i32, i32, i32) {
    %c0_i32 = arith.constant 0 : i32
    %c0_i32_0 = arith.constant 0 : i32
    %c0_i32_1 = arith.constant 0 : i32
    return %arg0, %c0_i32, %c0_i32_0 : i32, i32, i32
  }
  func.func @transform_5(%arg0: i32) -> (i32, i32, i32) {
    %c0_i32 = arith.constant 0 : i32
    %c0_i32_0 = arith.constant 0 : i32
    %c0_i32_1 = arith.constant 0 : i32
    return %arg0, %c0_i32, %c0_i32_0 : i32, i32, i32
  }
  func.func @transform_6(%arg0: i32) -> (i32, i32, i32) {
    %c0_i32 = arith.constant 0 : i32
    %c0_i32_0 = arith.constant 0 : i32
    %c0_i32_1 = arith.constant 0 : i32
    return %arg0, %c0_i32, %c0_i32_0 : i32, i32, i32
  }
}

module attributes {stable_mosaic.version = 11 : i64} {
  func.func @_fuse_kernel(%arg0: i32, %arg1: memref<1x8x16xf32, #tpu.memory_space<vmem>>, %arg2: memref<1x8x16xf32, #tpu.memory_space<vmem>>, %arg3: memref<8x1xf32, #tpu.memory_space<vmem>>, %arg4: memref<8x1xf32, #tpu.memory_space<vmem>>, %arg5: memref<8x1xf32, #tpu.memory_space<vmem>>, %arg6: memref<8x1xf32, #tpu.memory_space<vmem>>, %arg7: memref<1x8x16xf32, #tpu.memory_space<vmem>>) attributes {dimension_semantics = [#tpu.dimension_semantics<parallel>], iteration_bounds = array<i64: 2>, scalar_prefetch = 0 : i64, scratch_operands = 0 : i64, tpu.core_type = #tpu.core_type<tc>, window_params = [{transform_indices = @transform_0, window_bounds = array<i64: 1, 8, 16>}, {transform_indices = @transform_1, window_bounds = array<i64: 1, 8, 16>}, {pipeline_mode = #tpu.pipeline_mode<synchronous>, transform_indices = @transform_2, window_bounds = array<i64: 8, 1>}, {pipeline_mode = #tpu.pipeline_mode<synchronous>, transform_indices = @transform_3, window_bounds = array<i64: 8, 1>}, {pipeline_mode = #tpu.pipeline_mode<synchronous>, transform_indices = @transform_4, window_bounds = array<i64: 8, 1>}, {pipeline_mode = #tpu.pipeline_mode<synchronous>, transform_indices = @transform_5, window_bounds = array<i64: 8, 1>}, {transform_indices = @transform_6, window_bounds = array<i64: 1, 8, 16>}]} {
    %c0 = arith.constant 0 : index
    %c0_0 = arith.constant 0 : index
    %c0_1 = arith.constant 0 : index
    %0 = vector.load %arg1[%c0, %c0_0, %c0_1] : memref<1x8x16xf32, #tpu.memory_space<vmem>>, vector<1x8x16xf32>
    %1 = vector.shape_cast %0 : vector<1x8x16xf32> to vector<8x16xf32>
    %c0_2 = arith.constant 0 : index
    %c0_3 = arith.constant 0 : index
    %2 = vector.load %arg3[%c0_2, %c0_3] : memref<8x1xf32, #tpu.memory_space<vmem>>, vector<8x1xf32>
    %3 = vector.broadcast %2 : vector<8x1xf32> to vector<8x16xf32>
    %4 = arith.mulf %1, %3 : vector<8x16xf32>
    %c0_4 = arith.constant 0 : index
    %c0_5 = arith.constant 0 : index
    %5 = vector.load %arg4[%c0_4, %c0_5] : memref<8x1xf32, #tpu.memory_space<vmem>>, vector<8x1xf32>
    %6 = vector.broadcast %5 : vector<8x1xf32> to vector<8x16xf32>
    %7 = arith.addf %4, %6 : vector<8x16xf32>
    %c0_6 = arith.constant 0 : index
    %c0_7 = arith.constant 0 : index
    %c0_8 = arith.constant 0 : index
    %8 = vector.load %arg2[%c0_6, %c0_7, %c0_8] : memref<1x8x16xf32, #tpu.memory_space<vmem>>, vector<1x8x16xf32>
    %9 = vector.shape_cast %8 : vector<1x8x16xf32> to vector<8x16xf32>
    %c0_9 = arith.constant 0 : index
    %c0_10 = arith.constant 0 : index
    %10 = vector.load %arg5[%c0_9, %c0_10] : memref<8x1xf32, #tpu.memory_space<vmem>>, vector<8x1xf32>
    %11 = vector.broadcast %10 : vector<8x1xf32> to vector<8x16xf32>
    %12 = arith.mulf %9, %11 : vector<8x16xf32>
    %13 = arith.addf %7, %12 : vector<8x16xf32>
    %c0_11 = arith.constant 0 : index
    %c0_12 = arith.constant 0 : index
    %14 = vector.load %arg6[%c0_11, %c0_12] : memref<8x1xf32, #tpu.memory_space<vmem>>, vector<8x1xf32>
    %15 = vector.broadcast %14 : vector<8x1xf32> to vector<8x16xf32>
    %16 = arith.addf %13, %15 : vector<8x16xf32>
    %cst = arith.constant 0.000000e+00 : f32
    %17 = vector.broadcast %cst : f32 to vector<8x16xf32>
    %18 = arith.maximumf %16, %17 : vector<8x16xf32>
    %c0_13 = arith.constant 0 : index
    %c0_14 = arith.constant 0 : index
    %c0_15 = arith.constant 0 : index
    %19 = vector.load %arg7[%c0_13, %c0_14, %c0_15] : memref<1x8x16xf32, #tpu.memory_space<vmem>>, vector<1x8x16xf32>
    %20 = vector.shape_cast %19 : vector<1x8x16xf32> to vector<8x16xf32>
    %21 = vector.shape_cast %18 : vector<8x16xf32> to vector<1x8x16xf32>
    tpu.vector_store %arg7[%c0_13, %c0_14, %c0_15], %21 {strides = array<i32>} : memref<1x8x16xf32, #tpu.memory_space<vmem>>, vector<1x8x16xf32>,
    return
  }
  func.func @transform_0(%arg0: i32) -> (i32, i32, i32) {
    %c0_i32 = arith.constant 0 : i32
    %c0_i32_0 = arith.constant 0 : i32
    %c0_i32_1 = arith.constant 0 : i32
    return %arg0, %c0_i32, %c0_i32_0 : i32, i32, i32
  }
  func.func @transform_1(%arg0: i32) -> (i32, i32, i32) {
    %c0_i32 = arith.constant 0 : i32
    %c0_i32_0 = arith.constant 0 : i32
    %c0_i32_1 = arith.constant 0 : i32
    return %arg0, %c0_i32, %c0_i32_0 : i32, i32, i32
  }
  func.func @transform_2(%arg0: i32) -> (i32, i32) {
    %c0_i32 = arith.constant 0 : i32
    %c0_i32_0 = arith.constant 0 : i32
    %c0_i32_1 = arith.constant 0 : i32
    return %c0_i32, %c0_i32_0 : i32, i32
  }
  func.func @transform_3(%arg0: i32) -> (i32, i32) {
    %c0_i32 = arith.constant 0 : i32
    %c0_i32_0 = arith.constant 0 : i32
    %c0_i32_1 = arith.constant 0 : i32
    return %c0_i32, %c0_i32_0 : i32, i32
  }
  func.func @transform_4(%arg0: i32) -> (i32, i32) {
    %c0_i32 = arith.constant 0 : i32
    %c0_i32_0 = arith.constant 0 : i32
    %c0_i32_1 = arith.constant 0 : i32
    return %c0_i32, %c0_i32_0 : i32, i32
  }
  func.func @transform_5(%arg0: i32) -> (i32, i32) {
    %c0_i32 = arith.constant 0 : i32
    %c0_i32_0 = arith.constant 0 : i32
    %c0_i32_1 = arith.constant 0 : i32
    return %c0_i32, %c0_i32_0 : i32, i32
  }
  func.func @transform_6(%arg0: i32) -> (i32, i32, i32) {
    %c0_i32 = arith.constant 0 : i32
    %c0_i32_0 = arith.constant 0 : i32
    %c0_i32_1 = arith.constant 0 : i32
    return %arg0, %c0_i32, %c0_i32_0 : i32, i32, i32
  }
}

</mosaic_0001>

<llo_original>
// kernel: residual_block_1d.5
$region0: #{residual_block_1d.5}
  #allocation0 [shape = 'u32[]', space=smem, size = 0x4, offset = 0x4, fixed_abs, tag = 'smem constant byte address 0x4 - core index']
  #allocation1 [shape = 'u32[144,128]{1,0:T(1,128)}', space=vmem, size = 0x12000, scoped, tag = 'internal scratch']
  %s0 = inlined_call_operand.vmem [shape: f32[2,8,16], index: 0, kind: input, shape index: {}]
  %s1 = inlined_call_operand.vmem [shape: f32[2,8,16], index: 1, kind: input, shape index: {}]
  %s2 = inlined_call_operand.vmem [shape: f32[8,1], index: 2, kind: input, shape index: {}]
  %s3 = inlined_call_operand.vmem [shape: f32[8,1], index: 3, kind: input, shape index: {}]
  %s4 = inlined_call_operand.vmem [shape: f32[8,1], index: 4, kind: input, shape index: {}]
  %s5 = inlined_call_operand.vmem [shape: f32[8,1], index: 5, kind: input, shape index: {}]
  %s6 = inlined_call_operand.hbm [shape: f32[2,8,16], index: 6, kind: output, shape index: {}]
  %s7 = sld [smem:[#allocation0]]
  $region57: #{residual_block_1d.5} parent=0
    _
  %s9 = ssub.s32 1, %s7
  %s10 = scalar_select 0, %s9, %s7
  $region1: #{residual_block_1d.5} parent=0
    #allocation2 [shape = 'u8[8192]{0}', space=vmem, size = 0x2000, scoped, tag = 'output window, operand 0']
    #allocation3 [shape = 's32[2]{0}', space=sflag, size = 0x8, scoped, tag = 'scoped memory for residual_block_1d.5']
    %11 = vsyncpa [#allocation3], 0
    %s12 = scalar_lea.sflag [#allocation3], 1
    %13 = vsyncpa %s12, 0
    loop: start=0, step=1, limit=4
    $region2: #{residual_block_1d.5} parent=1 // loop_pre_header
      _
    $region3: #{residual_block_1d.5} parent=1 // loop_header
      %s15 = sphi 0, %s19
      %p16 = scmp.ge.s32.totalorder %s15, 4
      %s25 = sphi 0, %s27
      %s28 = sphi 0, %s25
      %s29 = sphi 0, %s28
      %s45 = sphi 0, %s29
      %s51 = sphi 0, %s53
      %s54 = sphi 0, %s51
      %s55 = sphi 0, %s54
      %s71 = sphi 0, %s55
      %s75 = sphi 0, %s75
      %s77 = sphi 0, %s75
      %s78 = sphi 0, %s77
      %s92 = sphi 0, %s78
      %s96 = sphi 0, %s96
      %s98 = sphi 0, %s96
      %s99 = sphi 0, %s98
      %s113 = sphi 0, %s99
      %s117 = sphi 0, %s117
      %s119 = sphi 0, %s117
      %s120 = sphi 0, %s119
      %s134 = sphi 0, %s120
      %s138 = sphi 0, %s138
      %s140 = sphi 0, %s138
      %s141 = sphi 0, %s140
      %s155 = sphi 0, %s141
      %s161 = sphi 0, %s163
      %s164 = sphi 0, %s161
      %s165 = sphi 0, %s164
      %s181 = sphi 0, %s165
    $region4: #{residual_block_1d.5} parent=1 // loop_header_branch
      %18 = sbr.rel (%p16) target = $region8
    $region5: #{residual_block_1d.5} parent=1 // loop_body
      %s20 = ssub.s32 %s15, 1
      %s21 = ssub.s32 %s15, 2
      %s22 = sadd.s32 %s15, 1
      %s23 = ssub.s32 %s15, %s22
      %p24 = scmp.eq.s32.totalorder %s23, 0
      %s26 = sadd.s32 %s25, 1
      %s27 = scalar_select %p24, %s25, %s26
      %p30 = pneg %p24
      %p31 = scmp.eq.s32.totalorder %s15, 1
      %p32 = por %p30, %p31
      %p33 = scmp.ne.s32.totalorder %s25, %s28
      %p34 = scmp.eq.s32.totalorder %s15, 0
      %p35 = por %p33, %p34
      %p36 = scmp.ne.s32.totalorder %s25, %s28
      %p37 = scmp.eq.s32.totalorder %s20, 1
      %p38 = por %p36, %p37
      %p39 = scmp.ne.s32.totalorder %s28, %s29
      %p40 = scmp.eq.s32.totalorder %s20, 0
      %p41 = por %p39, %p40
      %p42 = scmp.ne.s32.totalorder %s28, %s29
      %p43 = scmp.eq.s32.totalorder %s21, 1
      %p44 = por %p42, %p43
      %p46 = scmp.ne.s32.totalorder %s29, %s45
      %p47 = scmp.eq.s32.totalorder %s21, 0
      %p48 = por %p46, %p47
      %s49 = ssub.s32 %s15, %s22
      %p50 = scmp.eq.s32.totalorder %s49, 0
      %s52 = sadd.s32 %s51, 1
      %s53 = scalar_select %p50, %s51, %s52
      %p56 = pneg %p50
      %p57 = scmp.eq.s32.totalorder %s15, 1
      %p58 = por %p56, %p57
      %p59 = scmp.ne.s32.totalorder %s51, %s54
      %p60 = scmp.eq.s32.totalorder %s15, 0
      %p61 = por %p59, %p60
      %p62 = scmp.ne.s32.totalorder %s51, %s54
      %p63 = scmp.eq.s32.totalorder %s20, 1
      %p64 = por %p62, %p63
      %p65 = scmp.ne.s32.totalorder %s54, %s55
      %p66 = scmp.eq.s32.totalorder %s20, 0
      %p67 = por %p65, %p66
      %p68 = scmp.ne.s32.totalorder %s54, %s55
      %p69 = scmp.eq.s32.totalorder %s21, 1
      %p70 = por %p68, %p69
      %p72 = scmp.ne.s32.totalorder %s55, %s71
      %p73 = scmp.eq.s32.totalorder %s21, 0
      %p74 = por %p72, %p73
      %s76 = sadd.s32 %s75, 1
      %p79 = scmp.eq.s32.totalorder %s15, 1
      %p80 = scmp.ne.s32.totalorder %s75, %s77
      %p81 = scmp.eq.s32.totalorder %s15, 0
      %p82 = por %p80, %p81
      %p83 = scmp.ne.s32.totalorder %s75, %s77
      %p84 = scmp.eq.s32.totalorder %s20, 1
      %p85 = por %p83, %p84
      %p86 = scmp.ne.s32.totalorder %s77, %s78
      %p87 = scmp.eq.s32.totalorder %s20, 0
      %p88 = por %p86, %p87
      %p89 = scmp.ne.s32.totalorder %s77, %s78
      %p90 = scmp.eq.s32.totalorder %s21, 1
      %p91 = por %p89, %p90
      %p93 = scmp.ne.s32.totalorder %s78, %s92
      %p94 = scmp.eq.s32.totalorder %s21, 0
      %p95 = por %p93, %p94
      %s97 = sadd.s32 %s96, 1
      %p100 = scmp.eq.s32.totalorder %s15, 1
      %p101 = scmp.ne.s32.totalorder %s96, %s98
      %p102 = scmp.eq.s32.totalorder %s15, 0
      %p103 = por %p101, %p102
      %p104 = scmp.ne.s32.totalorder %s96, %s98
      %p105 = scmp.eq.s32.totalorder %s20, 1
      %p106 = por %p104, %p105
      %p107 = scmp.ne.s32.totalorder %s98, %s99
      %p108 = scmp.eq.s32.totalorder %s20, 0
      %p109 = por %p107, %p108
      %p110 = scmp.ne.s32.totalorder %s98, %s99
      %p111 = scmp.eq.s32.totalorder %s21, 1
      %p112 = por %p110, %p111
      %p114 = scmp.ne.s32.totalorder %s99, %s113
      %p115 = scmp.eq.s32.totalorder %s21, 0
      %p116 = por %p114, %p115
      %s118 = sadd.s32 %s117, 1
      %p121 = scmp.eq.s32.totalorder %s15, 1
      %p122 = scmp.ne.s32.totalorder %s117, %s119
      %p123 = scmp.eq.s32.totalorder %s15, 0
      %p124 = por %p122, %p123
      %p125 = scmp.ne.s32.totalorder %s117, %s119
      %p126 = scmp.eq.s32.totalorder %s20, 1
      %p127 = por %p125, %p126
      %p128 = scmp.ne.s32.totalorder %s119, %s120
      %p129 = scmp.eq.s32.totalorder %s20, 0
      %p130 = por %p128, %p129
      %p131 = scmp.ne.s32.totalorder %s119, %s120
      %p132 = scmp.eq.s32.totalorder %s21, 1
      %p133 = por %p131, %p132
      %p135 = scmp.ne.s32.totalorder %s120, %s134
      %p136 = scmp.eq.s32.totalorder %s21, 0
      %p137 = por %p135, %p136
      %s139 = sadd.s32 %s138, 1
      %p142 = scmp.eq.s32.totalorder %s15, 1
      %p143 = scmp.ne.s32.totalorder %s138, %s140
      %p144 = scmp.eq.s32.totalorder %s15, 0
      %p145 = por %p143, %p144
      %p146 = scmp.ne.s32.totalorder %s138, %s140
      %p147 = scmp.eq.s32.totalorder %s20, 1
      %p148 = por %p146, %p147
      %p149 = scmp.ne.s32.totalorder %s140, %s141
      %p150 = scmp.eq.s32.totalorder %s20, 0
      %p151 = por %p149, %p150
      %p152 = scmp.ne.s32.totalorder %s140, %s141
      %p153 = scmp.eq.s32.totalorder %s21, 1
      %p154 = por %p152, %p153
      %p156 = scmp.ne.s32.totalorder %s141, %s155
      %p157 = scmp.eq.s32.totalorder %s21, 0
      %p158 = por %p156, %p157
      %s159 = ssub.s32 %s15, %s22
      %p160 = scmp.eq.s32.totalorder %s159, 0
      %s162 = sadd.s32 %s161, 1
      %s163 = scalar_select %p160, %s161, %s162
      %p166 = pneg %p160
      %p167 = scmp.eq.s32.totalorder %s15, 1
      %p168 = por %p166, %p167
      %p169 = scmp.ne.s32.totalorder %s161, %s164
      %p170 = scmp.eq.s32.totalorder %s15, 0
      %p171 = por %p169, %p170
      %p172 = scmp.ne.s32.totalorder %s161, %s164
      %p173 = scmp.eq.s32.totalorder %s20, 1
      %p174 = por %p172, %p173
      %p175 = scmp.ne.s32.totalorder %s164, %s165
      %p176 = scmp.eq.s32.totalorder %s20, 0
      %p177 = por %p175, %p176
      %p178 = scmp.ne.s32.totalorder %s164, %s165
      %p179 = scmp.eq.s32.totalorder %s21, 1
      %p180 = por %p178, %p179
      %p182 = scmp.ne.s32.totalorder %s165, %s181
      %p183 = scmp.eq.s32.totalorder %s21, 0
      %p184 = por %p182, %p183
      %p185 = scmp.le.s32.totalorder 1, %s15
      %p186 = scmp.lt.s32.totalorder %s15, 3
      %p187 = pnand %p185, %p186
      %p188 = pneg %p187
      // Predicated region
      $region9: #{residual_block_1d.5} parent=5 // pred_check
        _
      $region10: #{residual_block_1d.5} parent=5 // pred_check_branch
        %190 = sbr.rel (%p187) target = $region12
      $region11: #{residual_block_1d.5} parent=5 // pred_region
        %s191 = ssub.s32 %s15, 1
        // Predicated region
        $region13: #{residual_block_1d.5} parent=11 // pred_check
          %p192 = pneg %p88
        $region14: #{residual_block_1d.5} parent=11 // pred_check_branch
          %194 = sbr.rel (%p192) target = $region16
        $region15: #{residual_block_1d.5} parent=11 // pred_region
          _
        $region16: #{residual_block_1d.5} parent=11 // pred_fallthru
          _
        // Predicated region
        $region17: #{residual_block_1d.5} parent=11 // pred_check
          %p195 = pneg %p109
        $region18: #{residual_block_1d.5} parent=11 // pred_check_branch
          %197 = sbr.rel (%p195) target = $region20
        $region19: #{residual_block_1d.5} parent=11 // pred_region
          _
        $region20: #{residual_block_1d.5} parent=11 // pred_fallthru
          _
        // Predicated region
        $region21: #{residual_block_1d.5} parent=11 // pred_check
          %p198 = pneg %p130
        $region22: #{residual_block_1d.5} parent=11 // pred_check_branch
          %200 = sbr.rel (%p198) target = $region24
        $region23: #{residual_block_1d.5} parent=11 // pred_region
          _
        $region24: #{residual_block_1d.5} parent=11 // pred_fallthru
          _
        // Predicated region
        $region25: #{residual_block_1d.5} parent=11 // pred_check
          %p201 = pneg %p151
        $region26: #{residual_block_1d.5} parent=11 // pred_check_branch
          %203 = sbr.rel (%p201) target = $region28
        $region27: #{residual_block_1d.5} parent=11 // pred_region
          _
        $region28: #{residual_block_1d.5} parent=11 // pred_fallthru
          _
      $region12: #{residual_block_1d.5} parent=5 // pred_fallthru
        _
      %p204 = scmp.lt.s32.totalorder %s15, 2
      // Predicated region
      $region29: #{residual_block_1d.5} parent=5 // pred_check
        %p205 = pneg %p204
      $region30: #{residual_block_1d.5} parent=5 // pred_check_branch
        %207 = sbr.rel (%p205) target = $region32
      $region31: #{residual_block_1d.5} parent=5 // pred_region
        // Predicated region
        $region33: #{residual_block_1d.5} parent=31 // pred_check
          %p208 = pneg %p35
        $region34: #{residual_block_1d.5} parent=31 // pred_check_branch
          %210 = sbr.rel (%p208) target = $region36
        $region35: #{residual_block_1d.5} parent=31 // pred_region
          %p211 = scmp.lt.s32.totalorder %s15, 1
          %s212 = scalar_select %p211, %s15, 1
          %s213 = smul.addr %s212, 8
          %s214 = scalar_lea.vmem %s0, %s213
        $region36: #{residual_block_1d.5} parent=31 // pred_fallthru
          _
        // Predicated region
        $region37: #{residual_block_1d.5} parent=31 // pred_check
          %p215 = pneg %p61
        $region38: #{residual_block_1d.5} parent=31 // pred_check_branch
          %217 = sbr.rel (%p215) target = $region40
        $region39: #{residual_block_1d.5} parent=31 // pred_region
          %p218 = scmp.lt.s32.totalorder %s15, 1
          %s219 = scalar_select %p218, %s15, 1
          %s220 = smul.addr %s219, 8
          %s221 = scalar_lea.vmem %s1, %s220
        $region40: #{residual_block_1d.5} parent=31 // pred_fallthru
          _
      $region32: #{residual_block_1d.5} parent=5 // pred_fallthru
        _
      %p222 = scmp.le.s32.totalorder 1, %s15
      %p223 = scmp.lt.s32.totalorder %s15, 3
      %p224 = pnand %p222, %p223
      %p225 = pneg %p224
      // Predicated region
      $region41: #{residual_block_1d.5} parent=5 // pred_check
        _
      $region42: #{residual_block_1d.5} parent=5 // pred_check_branch
        %227 = sbr.rel (%p224) target = $region44
      $region43: #{residual_block_1d.5} parent=5 // pred_region
        %s228 = ssub.s32 %s15, 1
        %p229 = scmp.lt.s32.totalorder %s20, 1
        %s230 = scalar_select %p229, %s20, 1
        %s231 = smul.addr %s230, 8
        %s232 = scalar_lea.vmem %s0, %s231
        %p233 = pneg %p41
        %p234 = pneg %p38
        %p235 = scmp.lt.s32.totalorder %s20, 1
        %s236 = scalar_select %p235, %s20, 1
        %s237 = smul.addr %s236, 8
        %s238 = scalar_lea.vmem %s1, %s237
        %p239 = pneg %p67
        %p240 = pneg %p64
        %p241 = pneg %p88
        %p242 = pneg %p85
        %p243 = pneg %p109
        %p244 = pneg %p106
        %p245 = pneg %p130
        %p246 = pneg %p127
        %p247 = pneg %p151
        %p248 = pneg %p148
        %p249 = pneg %p177
        %p250 = pneg %p174
        %s251 = sand.u32 %s164, 1
        %s252 = scalar_lea.sflag [#allocation3], %s251
        %s253 = sand.u32 %s164, 1
        %s254 = smul.addr %s253, 8
        %s255 = scalar_lea.vmem [#allocation2], %s254
        %p256 = scmp.lt.s32.totalorder %s20, 1
        %s257 = scalar_select %p256, %s20, 1
        %s258 = smul.addr %s257, 8
        %s259 = scalar_lea.vmem %s0, %s258
        %p260 = scmp.lt.s32.totalorder %s20, 1
        %s261 = scalar_select %p260, %s20, 1
        %s262 = smul.addr %s261, 8
        %s263 = scalar_lea.vmem %s1, %s262
        %v264 = vld [vmem:[%s259] sm:$0xff]
        %v265 = vld [vmem:[%s2] sm:$0xff]
        %267 = vset.pattern.permute.xlu0 0
        %268 = vperm.xlu0 %267, %v265
        %v269 = vpop.permute.xlu0 %268
        %v271 = vmul.f32 %v264, %v269
        %v272 = vld [vmem:[%s3] sm:$0xff]
        %274 = vset.pattern.permute.xlu0 0
        %275 = vperm.xlu0 %274, %v272
        %v276 = vpop.permute.xlu0 %275
        %v278 = vadd.f32 %v271, %v276
        %v279 = vld [vmem:[%s263] sm:$0xff]
        %v280 = vld [vmem:[%s4] sm:$0xff]
        %282 = vset.pattern.permute.xlu0 0
        %283 = vperm.xlu0 %282, %v280
        %v284 = vpop.permute.xlu0 %283
        %v286 = vmul.f32 %v279, %v284
        %v287 = vadd.f32 %v278, %v286
        %v288 = vld [vmem:[%s5] sm:$0xff]
        %290 = vset.pattern.permute.xlu0 0
        %291 = vperm.xlu0 %290, %v288
        %v292 = vpop.permute.xlu0 %291
        %v294 = vadd.f32 %v287, %v292
        %v295 = vmax.f32 %v294, 0.0
        %vm296 = vcmask 130048
        %297 = vst.msk [vmem:[%s255] sm:$0xff] %vm296, %v295
        %s298 = sand.u32 %s164, 1
        %s299 = scalar_lea.sflag [#allocation3], %s298
        %s300 = sand.u32 %s164, 1
        %s301 = smul.addr %s300, 8
        %s302 = scalar_lea.vmem [#allocation2], %s301
        // Predicated region
        $region45: #{residual_block_1d.5} parent=43 // pred_check
          %p303 = pneg %p174
        $region46: #{residual_block_1d.5} parent=43 // pred_check_branch
          %305 = sbr.rel (%p303) target = $region48
        $region47: #{residual_block_1d.5} parent=43 // pred_region
          %s307 = ssub.s32 128, 128
          %308 = vsyncadd %s299, %s307
          %s309 = smul.addr %s20, 128
          %s310 = scalar_lea.hbm %s6, %s309
          %s312 = sshll.u32 %s302, 4
          %s313 = int_to_ptr.vmem [resolvable:$true] %s312
          %315 = dma.vmem_to_hbm [thread:$0]  %s313, 128, %s310, %s299
        $region48: #{residual_block_1d.5} parent=43 // pred_fallthru
          _
      $region44: #{residual_block_1d.5} parent=5 // pred_fallthru
        _
      %p316 = scmp.le.s32.totalorder 2, %s15
      // Predicated region
      $region49: #{residual_block_1d.5} parent=5 // pred_check
        %p317 = pneg %p316
      $region50: #{residual_block_1d.5} parent=5 // pred_check_branch
        %319 = sbr.rel (%p317) target = $region52
      $region51: #{residual_block_1d.5} parent=5 // pred_region
        %s320 = ssub.s32 %s15, 2
        // Predicated region
        $region53: #{residual_block_1d.5} parent=51 // pred_check
          %p321 = pneg %p180
        $region54: #{residual_block_1d.5} parent=51 // pred_check_branch
          %323 = sbr.rel (%p321) target = $region56
        $region55: #{residual_block_1d.5} parent=51 // pred_region
          %s324 = sand.u32 %s165, 1
          %s325 = scalar_lea.sflag [#allocation3], %s324
          %s326 = sand.u32 %s165, 1
          %s327 = smul.addr %s326, 8
          %s328 = scalar_lea.vmem [#allocation2], %s327
          %329 = dma.done %s325, 128
        $region56: #{residual_block_1d.5} parent=51 // pred_fallthru
          _
      $region52: #{residual_block_1d.5} parent=5 // pred_fallthru
        _
    $region6: #{residual_block_1d.5} parent=1 // loop_footer
      %s19 = sadd.s32 1, %s15
    $region7: #{residual_block_1d.5} parent=1 // loop_footer_branch
      %14 = sbr.rel target = $region3
    $region8: #{residual_block_1d.5} parent=1 // loop_exit
      _
    %330 = vsyncpa [#allocation3], 1
    %s331 = scalar_lea.sflag [#allocation3], 1
    %332 = vsyncpa %s331, 1

// kernel: residual_block_1d.4
$region0: #{residual_block_1d.4}
  #allocation0 [shape = 'u32[]', space=smem, size = 0x4, offset = 0x4, fixed_abs, tag = 'smem constant byte address 0x4 - core index']
  #allocation1 [shape = 'u32[144,128]{1,0:T(1,128)}', space=vmem, size = 0x12000, scoped, tag = 'internal scratch']
  %s0 = inlined_call_operand.vmem [shape: f32[2,8,16], index: 0, kind: input, shape index: {}]
  %s1 = inlined_call_operand.vmem [shape: f32[8,56], index: 1, kind: input, shape index: {}]
  %s2 = inlined_call_operand.vmem [shape: f32[8,1], index: 2, kind: input, shape index: {}]
  %s3 = inlined_call_operand.vmem [shape: f32[8,1], index: 3, kind: input, shape index: {}]
  %s4 = inlined_call_operand.vmem [shape: f32[2,8,16], index: 4, kind: output, shape index: {0}]
  %s5 = inlined_call_operand.vmem [shape: f32[2,8,1], index: 5, kind: output, shape index: {1}]
  %s6 = inlined_call_operand.vmem [shape: f32[2,8,1], index: 6, kind: output, shape index: {2}]
  %7 = xla_tuple %s4, %s5, %s6
  %s8 = sld [smem:[#allocation0]]
  $region65: #{residual_block_1d.4} parent=0
    _
  %s10 = ssub.s32 1, %s8
  %s11 = scalar_select 0, %s10, %s8
  loop: start=0, step=1, limit=4
  $region2: #{residual_block_1d.4} parent=0 // loop_pre_header
    _
  $region3: #{residual_block_1d.4} parent=0 // loop_header
    %s13 = sphi 0, %s17
    %p14 = scmp.ge.s32.totalorder %s13, 4
    %s23 = sphi 0, %s25
    %s26 = sphi 0, %s23
    %s27 = sphi 0, %s26
    %s43 = sphi 0, %s27
    %s47 = sphi 0, %s47
    %s49 = sphi 0, %s47
    %s50 = sphi 0, %s49
    %s64 = sphi 0, %s50
    %s68 = sphi 0, %s68
    %s70 = sphi 0, %s68
    %s71 = sphi 0, %s70
    %s85 = sphi 0, %s71
    %s89 = sphi 0, %s89
    %s91 = sphi 0, %s89
    %s92 = sphi 0, %s91
    %s106 = sphi 0, %s92
    %s112 = sphi 0, %s114
    %s115 = sphi 0, %s112
    %s116 = sphi 0, %s115
    %s132 = sphi 0, %s116
    %s138 = sphi 0, %s140
    %s141 = sphi 0, %s138
    %s142 = sphi 0, %s141
    %s158 = sphi 0, %s142
    %s164 = sphi 0, %s166
    %s167 = sphi 0, %s164
    %s168 = sphi 0, %s167
    %s184 = sphi 0, %s168
  $region4: #{residual_block_1d.4} parent=0 // loop_header_branch
    %16 = sbr.rel (%p14) target = $region8
  $region5: #{residual_block_1d.4} parent=0 // loop_body
    %s18 = ssub.s32 %s13, 1
    %s19 = ssub.s32 %s13, 2
    %s20 = sadd.s32 %s13, 1
    %s21 = ssub.s32 %s13, %s20
    %p22 = scmp.eq.s32.totalorder %s21, 0
    %s24 = sadd.s32 %s23, 1
    %s25 = scalar_select %p22, %s23, %s24
    %p28 = pneg %p22
    %p29 = scmp.eq.s32.totalorder %s13, 1
    %p30 = por %p28, %p29
    %p31 = scmp.ne.s32.totalorder %s23, %s26
    %p32 = scmp.eq.s32.totalorder %s13, 0
    %p33 = por %p31, %p32
    %p34 = scmp.ne.s32.totalorder %s23, %s26
    %p35 = scmp.eq.s32.totalorder %s18, 1
    %p36 = por %p34, %p35
    %p37 = scmp.ne.s32.totalorder %s26, %s27
    %p38 = scmp.eq.s32.totalorder %s18, 0
    %p39 = por %p37, %p38
    %p40 = scmp.ne.s32.totalorder %s26, %s27
    %p41 = scmp.eq.s32.totalorder %s19, 1
    %p42 = por %p40, %p41
    %p44 = scmp.ne.s32.totalorder %s27, %s43
    %p45 = scmp.eq.s32.totalorder %s19, 0
    %p46 = por %p44, %p45
    %s48 = sadd.s32 %s47, 1
    %p51 = scmp.eq.s32.totalorder %s13, 1
    %p52 = scmp.ne.s32.totalorder %s47, %s49
    %p53 = scmp.eq.s32.totalorder %s13, 0
    %p54 = por %p52, %p53
    %p55 = scmp.ne.s32.totalorder %s47, %s49
    %p56 = scmp.eq.s32.totalorder %s18, 1
    %p57 = por %p55, %p56
    %p58 = scmp.ne.s32.totalorder %s49, %s50
    %p59 = scmp.eq.s32.totalorder %s18, 0
    %p60 = por %p58, %p59
    %p61 = scmp.ne.s32.totalorder %s49, %s50
    %p62 = scmp.eq.s32.totalorder %s19, 1
    %p63 = por %p61, %p62
    %p65 = scmp.ne.s32.totalorder %s50, %s64
    %p66 = scmp.eq.s32.totalorder %s19, 0
    %p67 = por %p65, %p66
    %s69 = sadd.s32 %s68, 1
    %p72 = scmp.eq.s32.totalorder %s13, 1
    %p73 = scmp.ne.s32.totalorder %s68, %s70
    %p74 = scmp.eq.s32.totalorder %s13, 0
    %p75 = por %p73, %p74
    %p76 = scmp.ne.s32.totalorder %s68, %s70
    %p77 = scmp.eq.s32.totalorder %s18, 1
    %p78 = por %p76, %p77
    %p79 = scmp.ne.s32.totalorder %s70, %s71
    %p80 = scmp.eq.s32.totalorder %s18, 0
    %p81 = por %p79, %p80
    %p82 = scmp.ne.s32.totalorder %s70, %s71
    %p83 = scmp.eq.s32.totalorder %s19, 1
    %p84 = por %p82, %p83
    %p86 = scmp.ne.s32.totalorder %s71, %s85
    %p87 = scmp.eq.s32.totalorder %s19, 0
    %p88 = por %p86, %p87
    %s90 = sadd.s32 %s89, 1
    %p93 = scmp.eq.s32.totalorder %s13, 1
    %p94 = scmp.ne.s32.totalorder %s89, %s91
    %p95 = scmp.eq.s32.totalorder %s13, 0
    %p96 = por %p94, %p95
    %p97 = scmp.ne.s32.totalorder %s89, %s91
    %p98 = scmp.eq.s32.totalorder %s18, 1
    %p99 = por %p97, %p98
    %p100 = scmp.ne.s32.totalorder %s91, %s92
    %p101 = scmp.eq.s32.totalorder %s18, 0
    %p102 = por %p100, %p101
    %p103 = scmp.ne.s32.totalorder %s91, %s92
    %p104 = scmp.eq.s32.totalorder %s19, 1
    %p105 = por %p103, %p104
    %p107 = scmp.ne.s32.totalorder %s92, %s106
    %p108 = scmp.eq.s32.totalorder %s19, 0
    %p109 = por %p107, %p108
    %s110 = ssub.s32 %s13, %s20
    %p111 = scmp.eq.s32.totalorder %s110, 0
    %s113 = sadd.s32 %s112, 1
    %s114 = scalar_select %p111, %s112, %s113
    %p117 = pneg %p111
    %p118 = scmp.eq.s32.totalorder %s13, 1
    %p119 = por %p117, %p118
    %p120 = scmp.ne.s32.totalorder %s112, %s115
    %p121 = scmp.eq.s32.totalorder %s13, 0
    %p122 = por %p120, %p121
    %p123 = scmp.ne.s32.totalorder %s112, %s115
    %p124 = scmp.eq.s32.totalorder %s18, 1
    %p125 = por %p123, %p124
    %p126 = scmp.ne.s32.totalorder %s115, %s116
    %p127 = scmp.eq.s32.totalorder %s18, 0
    %p128 = por %p126, %p127
    %p129 = scmp.ne.s32.totalorder %s115, %s116
    %p130 = scmp.eq.s32.totalorder %s19, 1
    %p131 = por %p129, %p130
    %p133 = scmp.ne.s32.totalorder %s116, %s132
    %p134 = scmp.eq.s32.totalorder %s19, 0
    %p135 = por %p133, %p134
    %s136 = ssub.s32 %s13, %s20
    %p137 = scmp.eq.s32.totalorder %s136, 0
    %s139 = sadd.s32 %s138, 1
    %s140 = scalar_select %p137, %s138, %s139
    %p143 = pneg %p137
    %p144 = scmp.eq.s32.totalorder %s13, 1
    %p145 = por %p143, %p144
    %p146 = scmp.ne.s32.totalorder %s138, %s141
    %p147 = scmp.eq.s32.totalorder %s13, 0
    %p148 = por %p146, %p147
    %p149 = scmp.ne.s32.totalorder %s138, %s141
    %p150 = scmp.eq.s32.totalorder %s18, 1
    %p151 = por %p149, %p150
    %p152 = scmp.ne.s32.totalorder %s141, %s142
    %p153 = scmp.eq.s32.totalorder %s18, 0
    %p154 = por %p152, %p153
    %p155 = scmp.ne.s32.totalorder %s141, %s142
    %p156 = scmp.eq.s32.totalorder %s19, 1
    %p157 = por %p155, %p156
    %p159 = scmp.ne.s32.totalorder %s142, %s158
    %p160 = scmp.eq.s32.totalorder %s19, 0
    %p161 = por %p159, %p160
    %s162 = ssub.s32 %s13, %s20
    %p163 = scmp.eq.s32.totalorder %s162, 0
    %s165 = sadd.s32 %s164, 1
    %s166 = scalar_select %p163, %s164, %s165
    %p169 = pneg %p163
    %p170 = scmp.eq.s32.totalorder %s13, 1
    %p171 = por %p169, %p170
    %p172 = scmp.ne.s32.totalorder %s164, %s167
    %p173 = scmp.eq.s32.totalorder %s13, 0
    %p174 = por %p172, %p173
    %p175 = scmp.ne.s32.totalorder %s164, %s167
    %p176 = scmp.eq.s32.totalorder %s18, 1
    %p177 = por %p175, %p176
    %p178 = scmp.ne.s32.totalorder %s167, %s168
    %p179 = scmp.eq.s32.totalorder %s18, 0
    %p180 = por %p178, %p179
    %p181 = scmp.ne.s32.totalorder %s167, %s168
    %p182 = scmp.eq.s32.totalorder %s19, 1
    %p183 = por %p181, %p182
    %p185 = scmp.ne.s32.totalorder %s168, %s184
    %p186 = scmp.eq.s32.totalorder %s19, 0
    %p187 = por %p185, %p186
    %p188 = scmp.le.s32.totalorder 1, %s13
    %p189 = scmp.lt.s32.totalorder %s13, 3
    %p190 = pnand %p188, %p189
    %p191 = pneg %p190
    // Predicated region
    $region9: #{residual_block_1d.4} parent=5 // pred_check
      _
    $region10: #{residual_block_1d.4} parent=5 // pred_check_branch
      %193 = sbr.rel (%p190) target = $region12
    $region11: #{residual_block_1d.4} parent=5 // pred_region
      %s194 = ssub.s32 %s13, 1
      // Predicated region
      $region13: #{residual_block_1d.4} parent=11 // pred_check
        %p195 = pneg %p60
      $region14: #{residual_block_1d.4} parent=11 // pred_check_branch
        %197 = sbr.rel (%p195) target = $region16
      $region15: #{residual_block_1d.4} parent=11 // pred_region
        _
      $region16: #{residual_block_1d.4} parent=11 // pred_fallthru
        _
      // Predicated region
      $region17: #{residual_block_1d.4} parent=11 // pred_check
        %p198 = pneg %p81
      $region18: #{residual_block_1d.4} parent=11 // pred_check_branch
        %200 = sbr.rel (%p198) target = $region20
      $region19: #{residual_block_1d.4} parent=11 // pred_region
        _
      $region20: #{residual_block_1d.4} parent=11 // pred_fallthru
        _
      // Predicated region
      $region21: #{residual_block_1d.4} parent=11 // pred_check
        %p201 = pneg %p102
      $region22: #{residual_block_1d.4} parent=11 // pred_check_branch
        %203 = sbr.rel (%p201) target = $region24
      $region23: #{residual_block_1d.4} parent=11 // pred_region
        _
      $region24: #{residual_block_1d.4} parent=11 // pred_fallthru
        _
    $region12: #{residual_block_1d.4} parent=5 // pred_fallthru
      _
    %p204 = scmp.lt.s32.totalorder %s13, 2
    // Predicated region
    $region25: #{residual_block_1d.4} parent=5 // pred_check
      %p205 = pneg %p204
    $region26: #{residual_block_1d.4} parent=5 // pred_check_branch
      %207 = sbr.rel (%p205) target = $region28
    $region27: #{residual_block_1d.4} parent=5 // pred_region
      // Predicated region
      $region29: #{residual_block_1d.4} parent=27 // pred_check
        %p208 = pneg %p33
      $region30: #{residual_block_1d.4} parent=27 // pred_check_branch
        %210 = sbr.rel (%p208) target = $region32
      $region31: #{residual_block_1d.4} parent=27 // pred_region
        %p211 = scmp.lt.s32.totalorder %s13, 1
        %s212 = scalar_select %p211, %s13, 1
        %s213 = smul.addr %s212, 8
        %s214 = scalar_lea.vmem %s0, %s213
      $region32: #{residual_block_1d.4} parent=27 // pred_fallthru
        _
    $region28: #{residual_block_1d.4} parent=5 // pred_fallthru
      _
    %p215 = scmp.le.s32.totalorder 1, %s13
    %p216 = scmp.lt.s32.totalorder %s13, 3
    %p217 = pnand %p215, %p216
    %p218 = pneg %p217
    // Predicated region
    $region33: #{residual_block_1d.4} parent=5 // pred_check
      _
    $region34: #{residual_block_1d.4} parent=5 // pred_check_branch
      %220 = sbr.rel (%p217) target = $region36
    $region35: #{residual_block_1d.4} parent=5 // pred_region
      %s221 = ssub.s32 %s13, 1
      %p222 = scmp.lt.s32.totalorder %s18, 1
      %s223 = scalar_select %p222, %s18, 1
      %s224 = smul.addr %s223, 8
      %s225 = scalar_lea.vmem %s0, %s224
      %p226 = pneg %p39
      %p227 = pneg %p36
      %p228 = pneg %p60
      %p229 = pneg %p57
      %p230 = pneg %p81
      %p231 = pneg %p78
      %p232 = pneg %p102
      %p233 = pneg %p99
      %p234 = pneg %p128
      %p235 = pneg %p125
      %p236 = scmp.lt.s32.totalorder %s18, 1
      %s237 = scalar_select %p236, %s18, 1
      %s238 = smul.addr %s237, 8
      %s239 = scalar_lea.vmem %s4, %s238
      %p240 = pneg %p154
      %p241 = pneg %p151
      %p242 = scmp.lt.s32.totalorder %s18, 1
      %s243 = scalar_select %p242, %s18, 1
      %s244 = smul.addr %s243, 8
      %s245 = scalar_lea.vmem %s5, %s244
      %p246 = pneg %p180
      %p247 = pneg %p177
      %p248 = scmp.lt.s32.totalorder %s18, 1
      %s249 = scalar_select %p248, %s18, 1
      %s250 = smul.addr %s249, 8
      %s251 = scalar_lea.vmem %s6, %s250
      %p252 = scmp.lt.s32.totalorder %s18, 1
      %s253 = scalar_select %p252, %s18, 1
      %s254 = smul.addr %s253, 8
      %s255 = scalar_lea.vmem %s0, %s254
      %p256 = scmp.lt.s32.totalorder %s18, 1
      %s257 = scalar_select %p256, %s18, 1
      %s258 = smul.addr %s257, 8
      %s259 = scalar_lea.vmem %s4, %s258
      %p260 = scmp.lt.s32.totalorder %s18, 1
      %s261 = scalar_select %p260, %s18, 1
      %s262 = smul.addr %s261, 8
      %s263 = scalar_lea.vmem %s5, %s262
      %p264 = scmp.lt.s32.totalorder %s18, 1
      %s265 = scalar_select %p264, %s18, 1
      %s266 = smul.addr %s265, 8
      %s267 = scalar_lea.vmem %s6, %s266
      %v268 = vld [vmem:[%s255] sm:$0xff]
      %v269 = vld [vmem:[%s2] sm:$0xff]
      %271 = vset.pattern.permute.xlu0 0
      %272 = vperm.xlu0 %271, %v269
      %v273 = vpop.permute.xlu0 %272
      %v275 = vmul.f32 %v268, %v273
      %v276 = vld [vmem:[%s3] sm:$0xff]
      %278 = vset.pattern.permute.xlu0 0
      %279 = vperm.xlu0 %278, %v276
      %v280 = vpop.permute.xlu0 %279
      %v282 = vadd.f32 %v275, %v280
      %v283 = vmax.f32 %v282, 0.0
      %285 = vrot.lane.b32.xlu0 %v283, 3
      %v286 = vpop.permute.xlu0 %285
      %vm288 = vcmask 23552
      %v289 = vsel %vm288, 0.0, %v286
      %vm290 = vcmask 154624
      %v291 = vsel %vm290, %v289, 0.0
      %293 = vrot.lane.b32.xlu0 %v291, 127
      %v294 = vpop.permute.xlu0 %293
      %296 = vrot.lane.b32.xlu0 %v291, 126
      %v297 = vpop.permute.xlu0 %296
      %299 = vrot.lane.b32.xlu0 %v291, 125
      %v300 = vpop.permute.xlu0 %299
      %302 = vrot.lane.b32.xlu0 %v291, 124
      %v303 = vpop.permute.xlu0 %302
      %305 = vrot.lane.b32.xlu0 %v291, 123
      %v306 = vpop.permute.xlu0 %305
      %308 = vrot.lane.b32.xlu0 %v291, 122
      %v309 = vpop.permute.xlu0 %308
      %v311 = vld [vmem:[%s1] sm:$0xff]
      %vm312 = vcmask 457728
      %v314 = vsel %vm312, %v311, 0
      %316 = vmatprep.subr.mxu0 0.0
      %317 = vmatpush1.msra.mxu0 0.0
      %318 = vmatprep.subr.mxu0 0.0
      %319 = vmatpush1.msra.mxu0 0.0
      %320 = vmatprep.subr.mxu0 0.0
      %321 = vmatpush1.msra.mxu0 0.0
      %322 = vmatprep.subr.mxu0 0.0
      %323 = vmatpush1.msra.mxu0 0.0
      %324 = vmatprep.subr.mxu0 0.0
      %325 = vmatpush1.msra.mxu0 0.0
      %326 = vmatprep.subr.mxu0 0.0
      %327 = vmatpush1.msra.mxu0 0.0
      %328 = vmatprep.subr.mxu0 0.0
      %329 = vmatpush1.msra.mxu0 0.0
      %330 = vmatprep.subr.mxu0 0.0
      %331 = vmatpush1.msra.mxu0 0.0
      %332 = vmatprep.subr.mxu0 0.0
      %333 = vmatpush1.msra.mxu0 0.0
      %334 = vmatprep.subr.mxu0 0.0
      %335 = vmatpush1.msra.mxu0 %v309
      %336 = vmatprep.subr.mxu0 0.0
      %337 = vmatpush1.msra.mxu0 %v306
      %338 = vmatprep.subr.mxu0 0.0
      %339 = vmatpush1.msra.mxu0 %v303
      %340 = vmatprep.subr.mxu0 0.0
      %341 = vmatpush1.msra.mxu0 %v300
      %342 = vmatprep.subr.mxu0 0.0
      %343 = vmatpush1.msra.mxu0 %v297
      %344 = vmatprep.subr.mxu0 0.0
      %345 = vmatpush1.msra.mxu0 %v294
      %346 = vmatprep.subr.mxu0 0.0
      %347 = vmatpush1.msra.mxu0 %v291
      %348 = vmatprep.subr.mxu0 0.0
      %349 = vmatpush2.msra.mxu0 0.0
      %350 = vmatprep.subr.mxu0 0.0
      %351 = vmatpush2.msra.mxu0 0.0
      %352 = vmatprep.subr.mxu0 0.0
      %353 = vmatpush2.msra.mxu0 0.0
      %354 = vmatprep.subr.mxu0 0.0
      %355 = vmatpush2.msra.mxu0 0.0
      %356 = vmatprep.subr.mxu0 0.0
      %357 = vmatpush2.msra.mxu0 0.0
      %358 = vmatprep.subr.mxu0 0.0
      %359 = vmatpush2.msra.mxu0 0.0
      %360 = vmatprep.subr.mxu0 0.0
      %361 = vmatpush2.msra.mxu0 0.0
      %362 = vmatprep.subr.mxu0 0.0
      %363 = vmatpush2.msra.mxu0 0.0
      %364 = vmatprep.subr.mxu0 0.0
      %365 = vmatpush2.msra.mxu0 0.0
      %366 = vmatprep.subr.mxu0 0.0
      %367 = vmatpush2.msra.mxu0 0.0
      %368 = vmatprep.subr.mxu0 0.0
      %369 = vmatpush2.msra.mxu0 0.0
      %370 = vmatprep.subr.mxu0 0.0
      %371 = vmatpush2.msra.mxu0 0.0
      %372 = vmatprep.subr.mxu0 0.0
      %373 = vmatpush2.msra.mxu0 0.0
      %374 = vmatprep.subr.mxu0 0.0
      %375 = vmatpush2.msra.mxu0 0.0
      %376 = vmatprep.subr.mxu0 0.0
      %377 = vmatpush2.msra.mxu0 0.0
      %378 = vmatprep.subr.mxu0 0.0
      %379 = vmatpush2.msra.mxu0 0.0
      %380 = vmatprep.mubr.f32.mxu0 0.0
      %381 = vmatmul.mubr.f32.gmra.mxu0 %v314
      %v382 = vpop.f32.mrf.mxu0
      %v383 = vadd.f32 0.0, %v382
      %v384 = vpop.f32.mrf.mxu0
      %385 = vdwg.mxu0
      %vm386 = vcmask 130048
      %387 = vst.msk [vmem:[%s259] sm:$0xff] %vm386, %v383
      %v388 = vsel %vm386, %v383, 0.0
      %389 = vadd.xlane.f32.xlu0 %v388
      %v390 = vpop.xlane.xlu0 %389
      %vm391 = vcmask 7168
      %392 = vst.msk [vmem:[%s263] sm:$0xff] %vm391, %v390
      %v393 = vmul.f32 %v383, %v383
      %v394 = vsel %vm386, %v393, 0.0
      %395 = vadd.xlane.f32.xlu0 %v394
      %v396 = vpop.xlane.xlu0 %395
      %397 = vst.msk [vmem:[%s267] sm:$0xff] %vm391, %v396
      %p398 = scmp.lt.s32.totalorder %s18, 1
      %s399 = scalar_select %p398, %s18, 1
      %s400 = smul.addr %s399, 8
      %s401 = scalar_lea.vmem %s4, %s400
      %p402 = scmp.lt.s32.totalorder %s18, 1
      %s403 = scalar_select %p402, %s18, 1
      %s404 = smul.addr %s403, 8
      %s405 = scalar_lea.vmem %s5, %s404
      %p406 = scmp.lt.s32.totalorder %s18, 1
      %s407 = scalar_select %p406, %s18, 1
      %s408 = smul.addr %s407, 8
      %s409 = scalar_lea.vmem %s6, %s408
      // Predicated region
      $region37: #{residual_block_1d.4} parent=35 // pred_check
        %p410 = pneg %p125
      $region38: #{residual_block_1d.4} parent=35 // pred_check_branch
        %412 = sbr.rel (%p410) target = $region40
      $region39: #{residual_block_1d.4} parent=35 // pred_region
        _
      $region40: #{residual_block_1d.4} parent=35 // pred_fallthru
        _
      // Predicated region
      $region41: #{residual_block_1d.4} parent=35 // pred_check
        %p413 = pneg %p151
      $region42: #{residual_block_1d.4} parent=35 // pred_check_branch
        %415 = sbr.rel (%p413) target = $region44
      $region43: #{residual_block_1d.4} parent=35 // pred_region
        _
      $region44: #{residual_block_1d.4} parent=35 // pred_fallthru
        _
      // Predicated region
      $region45: #{residual_block_1d.4} parent=35 // pred_check
        %p416 = pneg %p177
      $region46: #{residual_block_1d.4} parent=35 // pred_check_branch
        %418 = sbr.rel (%p416) target = $region48
      $region47: #{residual_block_1d.4} parent=35 // pred_region
        _
      $region48: #{residual_block_1d.4} parent=35 // pred_fallthru
        _
    $region36: #{residual_block_1d.4} parent=5 // pred_fallthru
      _
    %p419 = scmp.le.s32.totalorder 2, %s13
    // Predicated region
    $region49: #{residual_block_1d.4} parent=5 // pred_check
      %p420 = pneg %p419
    $region50: #{residual_block_1d.4} parent=5 // pred_check_branch
      %422 = sbr.rel (%p420) target = $region52
    $region51: #{residual_block_1d.4} parent=5 // pred_region
      %s423 = ssub.s32 %s13, 2
      // Predicated region
      $region53: #{residual_block_1d.4} parent=51 // pred_check
        %p424 = pneg %p131
      $region54: #{residual_block_1d.4} parent=51 // pred_check_branch
        %426 = sbr.rel (%p424) target = $region56
      $region55: #{residual_block_1d.4} parent=51 // pred_region
        %p427 = scmp.lt.s32.totalorder %s19, 1
        %s428 = scalar_select %p427, %s19, 1
        %s429 = smul.addr %s428, 8
        %s430 = scalar_lea.vmem %s4, %s429
      $region56: #{residual_block_1d.4} parent=51 // pred_fallthru
        _
      // Predicated region
      $region57: #{residual_block_1d.4} parent=51 // pred_check
        %p431 = pneg %p157
      $region58: #{residual_block_1d.4} parent=51 // pred_check_branch
        %433 = sbr.rel (%p431) target = $region60
      $region59: #{residual_block_1d.4} parent=51 // pred_region
        %p434 = scmp.lt.s32.totalorder %s19, 1
        %s435 = scalar_select %p434, %s19, 1
        %s436 = smul.addr %s435, 8
        %s437 = scalar_lea.vmem %s5, %s436
      $region60: #{residual_block_1d.4} parent=51 // pred_fallthru
        _
      // Predicated region
      $region61: #{residual_block_1d.4} parent=51 // pred_check
        %p438 = pneg %p183
      $region62: #{residual_block_1d.4} parent=51 // pred_check_branch
        %440 = sbr.rel (%p438) target = $region64
      $region63: #{residual_block_1d.4} parent=51 // pred_region
        %p441 = scmp.lt.s32.totalorder %s19, 1
        %s442 = scalar_select %p441, %s19, 1
        %s443 = smul.addr %s442, 8
        %s444 = scalar_lea.vmem %s6, %s443
      $region64: #{residual_block_1d.4} parent=51 // pred_fallthru
        _
    $region52: #{residual_block_1d.4} parent=5 // pred_fallthru
      _
  $region6: #{residual_block_1d.4} parent=0 // loop_footer
    %s17 = sadd.s32 1, %s13
  $region7: #{residual_block_1d.4} parent=0 // loop_footer_branch
    %12 = sbr.rel target = $region3
  $region8: #{residual_block_1d.4} parent=0 // loop_exit
    _

// kernel: residual_block_1d.3
$region0: #{residual_block_1d.3}
  #allocation0 [shape = 'u32[]', space=smem, size = 0x4, offset = 0x4, fixed_abs, tag = 'smem constant byte address 0x4 - core index']
  #allocation1 [shape = 'u32[144,128]{1,0:T(1,128)}', space=vmem, size = 0x12000, scoped, tag = 'internal scratch']
  %s0 = inlined_call_operand.vmem [shape: f32[2,8,22], index: 0, kind: input, shape index: {}]
  %s1 = inlined_call_operand.vmem [shape: f32[8,56], index: 1, kind: input, shape index: {}]
  %s2 = inlined_call_operand.vmem [shape: f32[8,8], index: 2, kind: input, shape index: {}]
  %s3 = inlined_call_operand.vmem [shape: f32[2,8,16], index: 3, kind: output, shape index: {0}]
  %s4 = inlined_call_operand.vmem [shape: f32[2,8,16], index: 4, kind: output, shape index: {1}]
  %s5 = inlined_call_operand.vmem [shape: f32[2,8,1], index: 5, kind: output, shape index: {2}]
  %s6 = inlined_call_operand.vmem [shape: f32[2,8,1], index: 6, kind: output, shape index: {3}]
  %s7 = inlined_call_operand.vmem [shape: f32[2,8,1], index: 7, kind: output, shape index: {4}]
  %s8 = inlined_call_operand.vmem [shape: f32[2,8,1], index: 8, kind: output, shape index: {5}]
  %9 = xla_tuple %s3, %s4, %s5, %s6, %s7, %s8
  %s10 = sld [smem:[#allocation0]]
  $region85: #{residual_block_1d.3} parent=0
    _
  %s12 = ssub.s32 1, %s10
  %s13 = scalar_select 0, %s12, %s10
  loop: start=0, step=1, limit=4
  $region2: #{residual_block_1d.3} parent=0 // loop_pre_header
    _
  $region3: #{residual_block_1d.3} parent=0 // loop_header
    %s15 = sphi 0, %s19
    %p16 = scmp.ge.s32.totalorder %s15, 4
    %s25 = sphi 0, %s27
    %s28 = sphi 0, %s25
    %s29 = sphi 0, %s28
    %s45 = sphi 0, %s29
    %s49 = sphi 0, %s49
    %s51 = sphi 0, %s49
    %s52 = sphi 0, %s51
    %s66 = sphi 0, %s52
    %s70 = sphi 0, %s70
    %s72 = sphi 0, %s70
    %s73 = sphi 0, %s72
    %s87 = sphi 0, %s73
    %s93 = sphi 0, %s95
    %s96 = sphi 0, %s93
    %s97 = sphi 0, %s96
    %s113 = sphi 0, %s97
    %s119 = sphi 0, %s121
    %s122 = sphi 0, %s119
    %s123 = sphi 0, %s122
    %s139 = sphi 0, %s123
    %s145 = sphi 0, %s147
    %s148 = sphi 0, %s145
    %s149 = sphi 0, %s148
    %s165 = sphi 0, %s149
    %s171 = sphi 0, %s173
    %s174 = sphi 0, %s171
    %s175 = sphi 0, %s174
    %s191 = sphi 0, %s175
    %s197 = sphi 0, %s199
    %s200 = sphi 0, %s197
    %s201 = sphi 0, %s200
    %s217 = sphi 0, %s201
    %s223 = sphi 0, %s225
    %s226 = sphi 0, %s223
    %s227 = sphi 0, %s226
    %s243 = sphi 0, %s227
  $region4: #{residual_block_1d.3} parent=0 // loop_header_branch
    %18 = sbr.rel (%p16) target = $region8
  $region5: #{residual_block_1d.3} parent=0 // loop_body
    %s20 = ssub.s32 %s15, 1
    %s21 = ssub.s32 %s15, 2
    %s22 = sadd.s32 %s15, 1
    %s23 = ssub.s32 %s15, %s22
    %p24 = scmp.eq.s32.totalorder %s23, 0
    %s26 = sadd.s32 %s25, 1
    %s27 = scalar_select %p24, %s25, %s26
    %p30 = pneg %p24
    %p31 = scmp.eq.s32.totalorder %s15, 1
    %p32 = por %p30, %p31
    %p33 = scmp.ne.s32.totalorder %s25, %s28
    %p34 = scmp.eq.s32.totalorder %s15, 0
    %p35 = por %p33, %p34
    %p36 = scmp.ne.s32.totalorder %s25, %s28
    %p37 = scmp.eq.s32.totalorder %s20, 1
    %p38 = por %p36, %p37
    %p39 = scmp.ne.s32.totalorder %s28, %s29
    %p40 = scmp.eq.s32.totalorder %s20, 0
    %p41 = por %p39, %p40
    %p42 = scmp.ne.s32.totalorder %s28, %s29
    %p43 = scmp.eq.s32.totalorder %s21, 1
    %p44 = por %p42, %p43
    %p46 = scmp.ne.s32.totalorder %s29, %s45
    %p47 = scmp.eq.s32.totalorder %s21, 0
    %p48 = por %p46, %p47
    %s50 = sadd.s32 %s49, 1
    %p53 = scmp.eq.s32.totalorder %s15, 1
    %p54 = scmp.ne.s32.totalorder %s49, %s51
    %p55 = scmp.eq.s32.totalorder %s15, 0
    %p56 = por %p54, %p55
    %p57 = scmp.ne.s32.totalorder %s49, %s51
    %p58 = scmp.eq.s32.totalorder %s20, 1
    %p59 = por %p57, %p58
    %p60 = scmp.ne.s32.totalorder %s51, %s52
    %p61 = scmp.eq.s32.totalorder %s20, 0
    %p62 = por %p60, %p61
    %p63 = scmp.ne.s32.totalorder %s51, %s52
    %p64 = scmp.eq.s32.totalorder %s21, 1
    %p65 = por %p63, %p64
    %p67 = scmp.ne.s32.totalorder %s52, %s66
    %p68 = scmp.eq.s32.totalorder %s21, 0
    %p69 = por %p67, %p68
    %s71 = sadd.s32 %s70, 1
    %p74 = scmp.eq.s32.totalorder %s15, 1
    %p75 = scmp.ne.s32.totalorder %s70, %s72
    %p76 = scmp.eq.s32.totalorder %s15, 0
    %p77 = por %p75, %p76
    %p78 = scmp.ne.s32.totalorder %s70, %s72
    %p79 = scmp.eq.s32.totalorder %s20, 1
    %p80 = por %p78, %p79
    %p81 = scmp.ne.s32.totalorder %s72, %s73
    %p82 = scmp.eq.s32.totalorder %s20, 0
    %p83 = por %p81, %p82
    %p84 = scmp.ne.s32.totalorder %s72, %s73
    %p85 = scmp.eq.s32.totalorder %s21, 1
    %p86 = por %p84, %p85
    %p88 = scmp.ne.s32.totalorder %s73, %s87
    %p89 = scmp.eq.s32.totalorder %s21, 0
    %p90 = por %p88, %p89
    %s91 = ssub.s32 %s15, %s22
    %p92 = scmp.eq.s32.totalorder %s91, 0
    %s94 = sadd.s32 %s93, 1
    %s95 = scalar_select %p92, %s93, %s94
    %p98 = pneg %p92
    %p99 = scmp.eq.s32.totalorder %s15, 1
    %p100 = por %p98, %p99
    %p101 = scmp.ne.s32.totalorder %s93, %s96
    %p102 = scmp.eq.s32.totalorder %s15, 0
    %p103 = por %p101, %p102
    %p104 = scmp.ne.s32.totalorder %s93, %s96
    %p105 = scmp.eq.s32.totalorder %s20, 1
    %p106 = por %p104, %p105
    %p107 = scmp.ne.s32.totalorder %s96, %s97
    %p108 = scmp.eq.s32.totalorder %s20, 0
    %p109 = por %p107, %p108
    %p110 = scmp.ne.s32.totalorder %s96, %s97
    %p111 = scmp.eq.s32.totalorder %s21, 1
    %p112 = por %p110, %p111
    %p114 = scmp.ne.s32.totalorder %s97, %s113
    %p115 = scmp.eq.s32.totalorder %s21, 0
    %p116 = por %p114, %p115
    %s117 = ssub.s32 %s15, %s22
    %p118 = scmp.eq.s32.totalorder %s117, 0
    %s120 = sadd.s32 %s119, 1
    %s121 = scalar_select %p118, %s119, %s120
    %p124 = pneg %p118
    %p125 = scmp.eq.s32.totalorder %s15, 1
    %p126 = por %p124, %p125
    %p127 = scmp.ne.s32.totalorder %s119, %s122
    %p128 = scmp.eq.s32.totalorder %s15, 0
    %p129 = por %p127, %p128
    %p130 = scmp.ne.s32.totalorder %s119, %s122
    %p131 = scmp.eq.s32.totalorder %s20, 1
    %p132 = por %p130, %p131
    %p133 = scmp.ne.s32.totalorder %s122, %s123
    %p134 = scmp.eq.s32.totalorder %s20, 0
    %p135 = por %p133, %p134
    %p136 = scmp.ne.s32.totalorder %s122, %s123
    %p137 = scmp.eq.s32.totalorder %s21, 1
    %p138 = por %p136, %p137
    %p140 = scmp.ne.s32.totalorder %s123, %s139
    %p141 = scmp.eq.s32.totalorder %s21, 0
    %p142 = por %p140, %p141
    %s143 = ssub.s32 %s15, %s22
    %p144 = scmp.eq.s32.totalorder %s143, 0
    %s146 = sadd.s32 %s145, 1
    %s147 = scalar_select %p144, %s145, %s146
    %p150 = pneg %p144
    %p151 = scmp.eq.s32.totalorder %s15, 1
    %p152 = por %p150, %p151
    %p153 = scmp.ne.s32.totalorder %s145, %s148
    %p154 = scmp.eq.s32.totalorder %s15, 0
    %p155 = por %p153, %p154
    %p156 = scmp.ne.s32.totalorder %s145, %s148
    %p157 = scmp.eq.s32.totalorder %s20, 1
    %p158 = por %p156, %p157
    %p159 = scmp.ne.s32.totalorder %s148, %s149
    %p160 = scmp.eq.s32.totalorder %s20, 0
    %p161 = por %p159, %p160
    %p162 = scmp.ne.s32.totalorder %s148, %s149
    %p163 = scmp.eq.s32.totalorder %s21, 1
    %p164 = por %p162, %p163
    %p166 = scmp.ne.s32.totalorder %s149, %s165
    %p167 = scmp.eq.s32.totalorder %s21, 0
    %p168 = por %p166, %p167
    %s169 = ssub.s32 %s15, %s22
    %p170 = scmp.eq.s32.totalorder %s169, 0
    %s172 = sadd.s32 %s171, 1
    %s173 = scalar_select %p170, %s171, %s172
    %p176 = pneg %p170
    %p177 = scmp.eq.s32.totalorder %s15, 1
    %p178 = por %p176, %p177
    %p179 = scmp.ne.s32.totalorder %s171, %s174
    %p180 = scmp.eq.s32.totalorder %s15, 0
    %p181 = por %p179, %p180
    %p182 = scmp.ne.s32.totalorder %s171, %s174
    %p183 = scmp.eq.s32.totalorder %s20, 1
    %p184 = por %p182, %p183
    %p185 = scmp.ne.s32.totalorder %s174, %s175
    %p186 = scmp.eq.s32.totalorder %s20, 0
    %p187 = por %p185, %p186
    %p188 = scmp.ne.s32.totalorder %s174, %s175
    %p189 = scmp.eq.s32.totalorder %s21, 1
    %p190 = por %p188, %p189
    %p192 = scmp.ne.s32.totalorder %s175, %s191
    %p193 = scmp.eq.s32.totalorder %s21, 0
    %p194 = por %p192, %p193
    %s195 = ssub.s32 %s15, %s22
    %p196 = scmp.eq.s32.totalorder %s195, 0
    %s198 = sadd.s32 %s197, 1
    %s199 = scalar_select %p196, %s197, %s198
    %p202 = pneg %p196
    %p203 = scmp.eq.s32.totalorder %s15, 1
    %p204 = por %p202, %p203
    %p205 = scmp.ne.s32.totalorder %s197, %s200
    %p206 = scmp.eq.s32.totalorder %s15, 0
    %p207 = por %p205, %p206
    %p208 = scmp.ne.s32.totalorder %s197, %s200
    %p209 = scmp.eq.s32.totalorder %s20, 1
    %p210 = por %p208, %p209
    %p211 = scmp.ne.s32.totalorder %s200, %s201
    %p212 = scmp.eq.s32.totalorder %s20, 0
    %p213 = por %p211, %p212
    %p214 = scmp.ne.s32.totalorder %s200, %s201
    %p215 = scmp.eq.s32.totalorder %s21, 1
    %p216 = por %p214, %p215
    %p218 = scmp.ne.s32.totalorder %s201, %s217
    %p219 = scmp.eq.s32.totalorder %s21, 0
    %p220 = por %p218, %p219
    %s221 = ssub.s32 %s15, %s22
    %p222 = scmp.eq.s32.totalorder %s221, 0
    %s224 = sadd.s32 %s223, 1
    %s225 = scalar_select %p222, %s223, %s224
    %p228 = pneg %p222
    %p229 = scmp.eq.s32.totalorder %s15, 1
    %p230 = por %p228, %p229
    %p231 = scmp.ne.s32.totalorder %s223, %s226
    %p232 = scmp.eq.s32.totalorder %s15, 0
    %p233 = por %p231, %p232
    %p234 = scmp.ne.s32.totalorder %s223, %s226
    %p235 = scmp.eq.s32.totalorder %s20, 1
    %p236 = por %p234, %p235
    %p237 = scmp.ne.s32.totalorder %s226, %s227
    %p238 = scmp.eq.s32.totalorder %s20, 0
    %p239 = por %p237, %p238
    %p240 = scmp.ne.s32.totalorder %s226, %s227
    %p241 = scmp.eq.s32.totalorder %s21, 1
    %p242 = por %p240, %p241
    %p244 = scmp.ne.s32.totalorder %s227, %s243
    %p245 = scmp.eq.s32.totalorder %s21, 0
    %p246 = por %p244, %p245
    %p247 = scmp.le.s32.totalorder 1, %s15
    %p248 = scmp.lt.s32.totalorder %s15, 3
    %p249 = pnand %p247, %p248
    %p250 = pneg %p249
    // Predicated region
    $region9: #{residual_block_1d.3} parent=5 // pred_check
      _
    $region10: #{residual_block_1d.3} parent=5 // pred_check_branch
      %252 = sbr.rel (%p249) target = $region12
    $region11: #{residual_block_1d.3} parent=5 // pred_region
      %s253 = ssub.s32 %s15, 1
      // Predicated region
      $region13: #{residual_block_1d.3} parent=11 // pred_check
        %p254 = pneg %p62
      $region14: #{residual_block_1d.3} parent=11 // pred_check_branch
        %256 = sbr.rel (%p254) target = $region16
      $region15: #{residual_block_1d.3} parent=11 // pred_region
        _
      $region16: #{residual_block_1d.3} parent=11 // pred_fallthru
        _
      // Predicated region
      $region17: #{residual_block_1d.3} parent=11 // pred_check
        %p257 = pneg %p83
      $region18: #{residual_block_1d.3} parent=11 // pred_check_branch
        %259 = sbr.rel (%p257) target = $region20
      $region19: #{residual_block_1d.3} parent=11 // pred_region
        _
      $region20: #{residual_block_1d.3} parent=11 // pred_fallthru
        _
    $region12: #{residual_block_1d.3} parent=5 // pred_fallthru
      _
    %p260 = scmp.lt.s32.totalorder %s15, 2
    // Predicated region
    $region21: #{residual_block_1d.3} parent=5 // pred_check
      %p261 = pneg %p260
    $region22: #{residual_block_1d.3} parent=5 // pred_check_branch
      %263 = sbr.rel (%p261) target = $region24
    $region23: #{residual_block_1d.3} parent=5 // pred_region
      // Predicated region
      $region25: #{residual_block_1d.3} parent=23 // pred_check
        %p264 = pneg %p35
      $region26: #{residual_block_1d.3} parent=23 // pred_check_branch
        %266 = sbr.rel (%p264) target = $region28
      $region27: #{residual_block_1d.3} parent=23 // pred_region
        %p267 = scmp.lt.s32.totalorder %s15, 1
        %s268 = scalar_select %p267, %s15, 1
        %s269 = smul.addr %s268, 8
        %s270 = scalar_lea.vmem %s0, %s269
      $region28: #{residual_block_1d.3} parent=23 // pred_fallthru
        _
    $region24: #{residual_block_1d.3} parent=5 // pred_fallthru
      _
    %p271 = scmp.le.s32.totalorder 1, %s15
    %p272 = scmp.lt.s32.totalorder %s15, 3
    %p273 = pnand %p271, %p272
    %p274 = pneg %p273
    // Predicated region
    $region29: #{residual_block_1d.3} parent=5 // pred_check
      _
    $region30: #{residual_block_1d.3} parent=5 // pred_check_branch
      %276 = sbr.rel (%p273) target = $region32
    $region31: #{residual_block_1d.3} parent=5 // pred_region
      %s277 = ssub.s32 %s15, 1
      %p278 = scmp.lt.s32.totalorder %s20, 1
      %s279 = scalar_select %p278, %s20, 1
      %s280 = smul.addr %s279, 8
      %s281 = scalar_lea.vmem %s0, %s280
      %p282 = pneg %p41
      %p283 = pneg %p38
      %p284 = pneg %p62
      %p285 = pneg %p59
      %p286 = pneg %p83
      %p287 = pneg %p80
      %p288 = pneg %p109
      %p289 = pneg %p106
      %p290 = scmp.lt.s32.totalorder %s20, 1
      %s291 = scalar_select %p290, %s20, 1
      %s292 = smul.addr %s291, 8
      %s293 = scalar_lea.vmem %s3, %s292
      %p294 = pneg %p135
      %p295 = pneg %p132
      %p296 = scmp.lt.s32.totalorder %s20, 1
      %s297 = scalar_select %p296, %s20, 1
      %s298 = smul.addr %s297, 8
      %s299 = scalar_lea.vmem %s4, %s298
      %p300 = pneg %p161
      %p301 = pneg %p158
      %p302 = scmp.lt.s32.totalorder %s20, 1
      %s303 = scalar_select %p302, %s20, 1
      %s304 = smul.addr %s303, 8
      %s305 = scalar_lea.vmem %s5, %s304
      %p306 = pneg %p187
      %p307 = pneg %p184
      %p308 = scmp.lt.s32.totalorder %s20, 1
      %s309 = scalar_select %p308, %s20, 1
      %s310 = smul.addr %s309, 8
      %s311 = scalar_lea.vmem %s6, %s310
      %p312 = pneg %p213
      %p313 = pneg %p210
      %p314 = scmp.lt.s32.totalorder %s20, 1
      %s315 = scalar_select %p314, %s20, 1
      %s316 = smul.addr %s315, 8
      %s317 = scalar_lea.vmem %s7, %s316
      %p318 = pneg %p239
      %p319 = pneg %p236
      %p320 = scmp.lt.s32.totalorder %s20, 1
      %s321 = scalar_select %p320, %s20, 1
      %s322 = smul.addr %s321, 8
      %s323 = scalar_lea.vmem %s8, %s322
      %p324 = scmp.lt.s32.totalorder %s20, 1
      %s325 = scalar_select %p324, %s20, 1
      %s326 = smul.addr %s325, 8
      %s327 = scalar_lea.vmem %s0, %s326
      %p328 = scmp.lt.s32.totalorder %s20, 1
      %s329 = scalar_select %p328, %s20, 1
      %s330 = smul.addr %s329, 8
      %s331 = scalar_lea.vmem %s3, %s330
      %p332 = scmp.lt.s32.totalorder %s20, 1
      %s333 = scalar_select %p332, %s20, 1
      %s334 = smul.addr %s333, 8
      %s335 = scalar_lea.vmem %s4, %s334
      %p336 = scmp.lt.s32.totalorder %s20, 1
      %s337 = scalar_select %p336, %s20, 1
      %s338 = smul.addr %s337, 8
      %s339 = scalar_lea.vmem %s5, %s338
      %p340 = scmp.lt.s32.totalorder %s20, 1
      %s341 = scalar_select %p340, %s20, 1
      %s342 = smul.addr %s341, 8
      %s343 = scalar_lea.vmem %s6, %s342
      %p344 = scmp.lt.s32.totalorder %s20, 1
      %s345 = scalar_select %p344, %s20, 1
      %s346 = smul.addr %s345, 8
      %s347 = scalar_lea.vmem %s7, %s346
      %p348 = scmp.lt.s32.totalorder %s20, 1
      %s349 = scalar_select %p348, %s20, 1
      %s350 = smul.addr %s349, 8
      %s351 = scalar_lea.vmem %s8, %s350
      %v352 = vld [vmem:[%s327] sm:$0xff]
      %354 = vrot.lane.b32.xlu0 %v352, 127
      %v355 = vpop.permute.xlu0 %354
      %357 = vrot.lane.b32.xlu0 %v352, 126
      %v358 = vpop.permute.xlu0 %357
      %360 = vrot.lane.b32.xlu0 %v352, 125
      %v361 = vpop.permute.xlu0 %360
      %363 = vrot.lane.b32.xlu0 %v352, 124
      %v364 = vpop.permute.xlu0 %363
      %366 = vrot.lane.b32.xlu0 %v352, 123
      %v367 = vpop.permute.xlu0 %366
      %369 = vrot.lane.b32.xlu0 %v352, 122
      %v370 = vpop.permute.xlu0 %369
      %v372 = vld [vmem:[%s1] sm:$0xff]
      %vm373 = vcmask 457728
      %v375 = vsel %vm373, %v372, 0
      %377 = vmatprep.subr.mxu0 0.0
      %378 = vmatpush1.msra.mxu0 0.0
      %379 = vmatprep.subr.mxu0 0.0
      %380 = vmatpush1.msra.mxu0 0.0
      %381 = vmatprep.subr.mxu0 0.0
      %382 = vmatpush1.msra.mxu0 0.0
      %383 = vmatprep.subr.mxu0 0.0
      %384 = vmatpush1.msra.mxu0 0.0
      %385 = vmatprep.subr.mxu0 0.0
      %386 = vmatpush1.msra.mxu0 0.0
      %387 = vmatprep.subr.mxu0 0.0
      %388 = vmatpush1.msra.mxu0 0.0
      %389 = vmatprep.subr.mxu0 0.0
      %390 = vmatpush1.msra.mxu0 0.0
      %391 = vmatprep.subr.mxu0 0.0
      %392 = vmatpush1.msra.mxu0 0.0
      %393 = vmatprep.subr.mxu0 0.0
      %394 = vmatpush1.msra.mxu0 0.0
      %395 = vmatprep.subr.mxu0 0.0
      %396 = vmatpush1.msra.mxu0 %v370
      %397 = vmatprep.subr.mxu0 0.0
      %398 = vmatpush1.msra.mxu0 %v367
      %399 = vmatprep.subr.mxu0 0.0
      %400 = vmatpush1.msra.mxu0 %v364
      %401 = vmatprep.subr.mxu0 0.0
      %402 = vmatpush1.msra.mxu0 %v361
      %403 = vmatprep.subr.mxu0 0.0
      %404 = vmatpush1.msra.mxu0 %v358
      %405 = vmatprep.subr.mxu0 0.0
      %406 = vmatpush1.msra.mxu0 %v355
      %407 = vmatprep.subr.mxu0 0.0
      %408 = vmatpush1.msra.mxu0 %v352
      %409 = vmatprep.subr.mxu0 0.0
      %410 = vmatpush2.msra.mxu0 0.0
      %411 = vmatprep.subr.mxu0 0.0
      %412 = vmatpush2.msra.mxu0 0.0
      %413 = vmatprep.subr.mxu0 0.0
      %414 = vmatpush2.msra.mxu0 0.0
      %415 = vmatprep.subr.mxu0 0.0
      %416 = vmatpush2.msra.mxu0 0.0
      %417 = vmatprep.subr.mxu0 0.0
      %418 = vmatpush2.msra.mxu0 0.0
      %419 = vmatprep.subr.mxu0 0.0
      %420 = vmatpush2.msra.mxu0 0.0
      %421 = vmatprep.subr.mxu0 0.0
      %422 = vmatpush2.msra.mxu0 0.0
      %423 = vmatprep.subr.mxu0 0.0
      %424 = vmatpush2.msra.mxu0 0.0
      %425 = vmatprep.subr.mxu0 0.0
      %426 = vmatpush2.msra.mxu0 0.0
      %427 = vmatprep.subr.mxu0 0.0
      %428 = vmatpush2.msra.mxu0 0.0
      %429 = vmatprep.subr.mxu0 0.0
      %430 = vmatpush2.msra.mxu0 0.0
      %431 = vmatprep.subr.mxu0 0.0
      %432 = vmatpush2.msra.mxu0 0.0
      %433 = vmatprep.subr.mxu0 0.0
      %434 = vmatpush2.msra.mxu0 0.0
      %435 = vmatprep.subr.mxu0 0.0
      %436 = vmatpush2.msra.mxu0 0.0
      %437 = vmatprep.subr.mxu0 0.0
      %438 = vmatpush2.msra.mxu0 0.0
      %439 = vmatprep.subr.mxu0 0.0
      %440 = vmatpush2.msra.mxu0 0.0
      %441 = vmatprep.mubr.f32.mxu0 0.0
      %442 = vmatmul.mubr.f32.gmra.mxu0 %v375
      %v443 = vpop.f32.mrf.mxu0
      %v444 = vadd.f32 0.0, %v443
      %v445 = vpop.f32.mrf.mxu0
      %446 = vdwg.mxu0
      %v447 = vld [vmem:[%s2] sm:$0xff]
      %vm448 = vcmask 64512
      %v450 = vsel %vm448, %v447, 0
      %452 = vmatprep.subr.mxu0 0.0
      %453 = vmatpush1.msra.mxu0 0.0
      %454 = vmatprep.subr.mxu0 0.0
      %455 = vmatpush1.msra.mxu0 0.0
      %456 = vmatprep.subr.mxu0 0.0
      %457 = vmatpush1.msra.mxu0 0.0
      %458 = vmatprep.subr.mxu0 0.0
      %459 = vmatpush1.msra.mxu0 0.0
      %460 = vmatprep.subr.mxu0 0.0
      %461 = vmatpush1.msra.mxu0 0.0
      %462 = vmatprep.subr.mxu0 0.0
      %463 = vmatpush1.msra.mxu0 0.0
      %464 = vmatprep.subr.mxu0 0.0
      %465 = vmatpush1.msra.mxu0 0.0
      %466 = vmatprep.subr.mxu0 0.0
      %467 = vmatpush1.msra.mxu0 0.0
      %468 = vmatprep.subr.mxu0 0.0
      %469 = vmatpush1.msra.mxu0 0.0
      %470 = vmatprep.subr.mxu0 0.0
      %471 = vmatpush1.msra.mxu0 0.0
      %472 = vmatprep.subr.mxu0 0.0
      %473 = vmatpush1.msra.mxu0 0.0
      %474 = vmatprep.subr.mxu0 0.0
      %475 = vmatpush1.msra.mxu0 0.0
      %476 = vmatprep.subr.mxu0 0.0
      %477 = vmatpush1.msra.mxu0 0.0
      %478 = vmatprep.subr.mxu0 0.0
      %479 = vmatpush1.msra.mxu0 0.0
      %480 = vmatprep.subr.mxu0 0.0
      %481 = vmatpush1.msra.mxu0 0.0
      %482 = vmatprep.subr.mxu0 0.0
      %483 = vmatpush1.msra.mxu0 %v361
      %484 = vmatprep.subr.mxu0 0.0
      %485 = vmatpush2.msra.mxu0 0.0
      %486 = vmatprep.subr.mxu0 0.0
      %487 = vmatpush2.msra.mxu0 0.0
      %488 = vmatprep.subr.mxu0 0.0
      %489 = vmatpush2.msra.mxu0 0.0
      %490 = vmatprep.subr.mxu0 0.0
      %491 = vmatpush2.msra.mxu0 0.0
      %492 = vmatprep.subr.mxu0 0.0
      %493 = vmatpush2.msra.mxu0 0.0
      %494 = vmatprep.subr.mxu0 0.0
      %495 = vmatpush2.msra.mxu0 0.0
      %496 = vmatprep.subr.mxu0 0.0
      %497 = vmatpush2.msra.mxu0 0.0
      %498 = vmatprep.subr.mxu0 0.0
      %499 = vmatpush2.msra.mxu0 0.0
      %500 = vmatprep.subr.mxu0 0.0
      %501 = vmatpush2.msra.mxu0 0.0
      %502 = vmatprep.subr.mxu0 0.0
      %503 = vmatpush2.msra.mxu0 0.0
      %504 = vmatprep.subr.mxu0 0.0
      %505 = vmatpush2.msra.mxu0 0.0
      %506 = vmatprep.subr.mxu0 0.0
      %507 = vmatpush2.msra.mxu0 0.0
      %508 = vmatprep.subr.mxu0 0.0
      %509 = vmatpush2.msra.mxu0 0.0
      %510 = vmatprep.subr.mxu0 0.0
      %511 = vmatpush2.msra.mxu0 0.0
      %512 = vmatprep.subr.mxu0 0.0
      %513 = vmatpush2.msra.mxu0 0.0
      %514 = vmatprep.subr.mxu0 0.0
      %515 = vmatpush2.msra.mxu0 0.0
      %516 = vmatprep.mubr.f32.mxu0 0.0
      %517 = vmatmul.mubr.f32.gmra.mxu0 %v450
      %v518 = vpop.f32.mrf.mxu0
      %v519 = vadd.f32 0.0, %v518
      %v520 = vpop.f32.mrf.mxu0
      %521 = vdwg.mxu0
      %vm522 = vcmask 130048
      %523 = vst.msk [vmem:[%s331] sm:$0xff] %vm522, %v444
      %524 = vst.msk [vmem:[%s335] sm:$0xff] %vm522, %v519
      %v525 = vsel %vm522, %v444, 0.0
      %526 = vadd.xlane.f32.xlu0 %v525
      %v527 = vpop.xlane.xlu0 %526
      %vm528 = vcmask 7168
      %529 = vst.msk [vmem:[%s339] sm:$0xff] %vm528, %v527
      %v530 = vmul.f32 %v444, %v444
      %v531 = vsel %vm522, %v530, 0.0
      %532 = vadd.xlane.f32.xlu0 %v531
      %v533 = vpop.xlane.xlu0 %532
      %534 = vst.msk [vmem:[%s343] sm:$0xff] %vm528, %v533
      %v535 = vsel %vm522, %v519, 0.0
      %536 = vadd.xlane.f32.xlu0 %v535
      %v537 = vpop.xlane.xlu0 %536
      %538 = vst.msk [vmem:[%s347] sm:$0xff] %vm528, %v537
      %v539 = vmul.f32 %v519, %v519
      %v540 = vsel %vm522, %v539, 0.0
      %541 = vadd.xlane.f32.xlu0 %v540
      %v542 = vpop.xlane.xlu0 %541
      %543 = vst.msk [vmem:[%s351] sm:$0xff] %vm528, %v542
      %p544 = scmp.lt.s32.totalorder %s20, 1
      %s545 = scalar_select %p544, %s20, 1
      %s546 = smul.addr %s545, 8
      %s547 = scalar_lea.vmem %s3, %s546
      %p548 = scmp.lt.s32.totalorder %s20, 1
      %s549 = scalar_select %p548, %s20, 1
      %s550 = smul.addr %s549, 8
      %s551 = scalar_lea.vmem %s4, %s550
      %p552 = scmp.lt.s32.totalorder %s20, 1
      %s553 = scalar_select %p552, %s20, 1
      %s554 = smul.addr %s553, 8
      %s555 = scalar_lea.vmem %s5, %s554
      %p556 = scmp.lt.s32.totalorder %s20, 1
      %s557 = scalar_select %p556, %s20, 1
      %s558 = smul.addr %s557, 8
      %s559 = scalar_lea.vmem %s6, %s558
      %p560 = scmp.lt.s32.totalorder %s20, 1
      %s561 = scalar_select %p560, %s20, 1
      %s562 = smul.addr %s561, 8
      %s563 = scalar_lea.vmem %s7, %s562
      %p564 = scmp.lt.s32.totalorder %s20, 1
      %s565 = scalar_select %p564, %s20, 1
      %s566 = smul.addr %s565, 8
      %s567 = scalar_lea.vmem %s8, %s566
      // Predicated region
      $region33: #{residual_block_1d.3} parent=31 // pred_check
        %p568 = pneg %p106
      $region34: #{residual_block_1d.3} parent=31 // pred_check_branch
        %570 = sbr.rel (%p568) target = $region36
      $region35: #{residual_block_1d.3} parent=31 // pred_region
        _
      $region36: #{residual_block_1d.3} parent=31 // pred_fallthru
        _
      // Predicated region
      $region37: #{residual_block_1d.3} parent=31 // pred_check
        %p571 = pneg %p132
      $region38: #{residual_block_1d.3} parent=31 // pred_check_branch
        %573 = sbr.rel (%p571) target = $region40
      $region39: #{residual_block_1d.3} parent=31 // pred_region
        _
      $region40: #{residual_block_1d.3} parent=31 // pred_fallthru
        _
      // Predicated region
      $region41: #{residual_block_1d.3} parent=31 // pred_check
        %p574 = pneg %p158
      $region42: #{residual_block_1d.3} parent=31 // pred_check_branch
        %576 = sbr.rel (%p574) target = $region44
      $region43: #{residual_block_1d.3} parent=31 // pred_region
        _
      $region44: #{residual_block_1d.3} parent=31 // pred_fallthru
        _
      // Predicated region
      $region45: #{residual_block_1d.3} parent=31 // pred_check
        %p577 = pneg %p184
      $region46: #{residual_block_1d.3} parent=31 // pred_check_branch
        %579 = sbr.rel (%p577) target = $region48
      $region47: #{residual_block_1d.3} parent=31 // pred_region
        _
      $region48: #{residual_block_1d.3} parent=31 // pred_fallthru
        _
      // Predicated region
      $region49: #{residual_block_1d.3} parent=31 // pred_check
        %p580 = pneg %p210
      $region50: #{residual_block_1d.3} parent=31 // pred_check_branch
        %582 = sbr.rel (%p580) target = $region52
      $region51: #{residual_block_1d.3} parent=31 // pred_region
        _
      $region52: #{residual_block_1d.3} parent=31 // pred_fallthru
        _
      // Predicated region
      $region53: #{residual_block_1d.3} parent=31 // pred_check
        %p583 = pneg %p236
      $region54: #{residual_block_1d.3} parent=31 // pred_check_branch
        %585 = sbr.rel (%p583) target = $region56
      $region55: #{residual_block_1d.3} parent=31 // pred_region
        _
      $region56: #{residual_block_1d.3} parent=31 // pred_fallthru
        _
    $region32: #{residual_block_1d.3} parent=5 // pred_fallthru
      _
    %p586 = scmp.le.s32.totalorder 2, %s15
    // Predicated region
    $region57: #{residual_block_1d.3} parent=5 // pred_check
      %p587 = pneg %p586
    $region58: #{residual_block_1d.3} parent=5 // pred_check_branch
      %589 = sbr.rel (%p587) target = $region60
    $region59: #{residual_block_1d.3} parent=5 // pred_region
      %s590 = ssub.s32 %s15, 2
      // Predicated region
      $region61: #{residual_block_1d.3} parent=59 // pred_check
        %p591 = pneg %p112
      $region62: #{residual_block_1d.3} parent=59 // pred_check_branch
        %593 = sbr.rel (%p591) target = $region64
      $region63: #{residual_block_1d.3} parent=59 // pred_region
        %p594 = scmp.lt.s32.totalorder %s21, 1
        %s595 = scalar_select %p594, %s21, 1
        %s596 = smul.addr %s595, 8
        %s597 = scalar_lea.vmem %s3, %s596
      $region64: #{residual_block_1d.3} parent=59 // pred_fallthru
        _
      // Predicated region
      $region65: #{residual_block_1d.3} parent=59 // pred_check
        %p598 = pneg %p138
      $region66: #{residual_block_1d.3} parent=59 // pred_check_branch
        %600 = sbr.rel (%p598) target = $region68
      $region67: #{residual_block_1d.3} parent=59 // pred_region
        %p601 = scmp.lt.s32.totalorder %s21, 1
        %s602 = scalar_select %p601, %s21, 1
        %s603 = smul.addr %s602, 8
        %s604 = scalar_lea.vmem %s4, %s603
      $region68: #{residual_block_1d.3} parent=59 // pred_fallthru
        _
      // Predicated region
      $region69: #{residual_block_1d.3} parent=59 // pred_check
        %p605 = pneg %p164
      $region70: #{residual_block_1d.3} parent=59 // pred_check_branch
        %607 = sbr.rel (%p605) target = $region72
      $region71: #{residual_block_1d.3} parent=59 // pred_region
        %p608 = scmp.lt.s32.totalorder %s21, 1
        %s609 = scalar_select %p608, %s21, 1
        %s610 = smul.addr %s609, 8
        %s611 = scalar_lea.vmem %s5, %s610
      $region72: #{residual_block_1d.3} parent=59 // pred_fallthru
        _
      // Predicated region
      $region73: #{residual_block_1d.3} parent=59 // pred_check
        %p612 = pneg %p190
      $region74: #{residual_block_1d.3} parent=59 // pred_check_branch
        %614 = sbr.rel (%p612) target = $region76
      $region75: #{residual_block_1d.3} parent=59 // pred_region
        %p615 = scmp.lt.s32.totalorder %s21, 1
        %s616 = scalar_select %p615, %s21, 1
        %s617 = smul.addr %s616, 8
        %s618 = scalar_lea.vmem %s6, %s617
      $region76: #{residual_block_1d.3} parent=59 // pred_fallthru
        _
      // Predicated region
      $region77: #{residual_block_1d.3} parent=59 // pred_check
        %p619 = pneg %p216
      $region78: #{residual_block_1d.3} parent=59 // pred_check_branch
        %621 = sbr.rel (%p619) target = $region80
      $region79: #{residual_block_1d.3} parent=59 // pred_region
        %p622 = scmp.lt.s32.totalorder %s21, 1
        %s623 = scalar_select %p622, %s21, 1
        %s624 = smul.addr %s623, 8
        %s625 = scalar_lea.vmem %s7, %s624
      $region80: #{residual_block_1d.3} parent=59 // pred_fallthru
        _
      // Predicated region
      $region81: #{residual_block_1d.3} parent=59 // pred_check
        %p626 = pneg %p242
      $region82: #{residual_block_1d.3} parent=59 // pred_check_branch
        %628 = sbr.rel (%p626) target = $region84
      $region83: #{residual_block_1d.3} parent=59 // pred_region
        %p629 = scmp.lt.s32.totalorder %s21, 1
        %s630 = scalar_select %p629, %s21, 1
        %s631 = smul.addr %s630, 8
        %s632 = scalar_lea.vmem %s8, %s631
      $region84: #{residual_block_1d.3} parent=59 // pred_fallthru
        _
    $region60: #{residual_block_1d.3} parent=5 // pred_fallthru
      _
  $region6: #{residual_block_1d.3} parent=0 // loop_footer
    %s19 = sadd.s32 1, %s15
  $region7: #{residual_block_1d.3} parent=0 // loop_footer_branch
    %14 = sbr.rel target = $region3
  $region8: #{residual_block_1d.3} parent=0 // loop_exit
    _

</llo_original>
